<compile_context>
chip_gen: v7x
topology: tpu7x:2x2x1
jax: 0.10.0
libtpu: 0.0.40
codegen_flags: <defaults>
</compile_context>

<pallas_src>
import functools

import numpy as np
import jax
import jax.numpy as jnp
from jax.experimental import pallas as pl
from jax.experimental.pallas import tpu as pltpu

_NEG_BIG = -1e30


def _mil_kernel(ht_ref, wa1t_ref, ba1_ref, wa2_ref, ba2_ref,
                wc1t_ref, bc1_ref, wc2t_ref, bc2_ref,
                bag_logits_ref, bag_prob_ref, yhat_ref, patch_prob_ref,
                m_sc, l_sc, acc_sc, s_sc,
                *, n_valid, tile_n, needs_mask):
    p = pl.program_id(0)            # 0: attention-stats pass, 1: classify pass
    t = pl.program_id(1)            # lane-tile index over the bag axis
    nt = pl.num_programs(1)
    start = pl.multiple_of(t * tile_n, tile_n)

    if needs_mask:
        col_ids = t * tile_n + jax.lax.broadcasted_iota(jnp.int32, (1, tile_n), 1)
        col_valid = col_ids < n_valid                    # [1, tile_n] (padded cols False)
    else:
        col_valid = None

    @pl.when(jnp.logical_and(p == 0, t == 0))
    def _init():
        m_sc[...] = jnp.full_like(m_sc, _NEG_BIG)
        l_sc[...] = jnp.zeros_like(l_sc)
        acc_sc[...] = jnp.zeros_like(acc_sc)

    @pl.when(p == 0)
    def _attention_pass():
        ht = ht_ref[...]                                                       # [F, tN] bf16
        a1 = jnp.tanh(jnp.dot(wa1t_ref[...], ht,
                              preferred_element_type=jnp.float32) + ba1_ref[...])  # [D, tN]
        scores = jnp.sum(a1 * wa2_ref[...], axis=0, keepdims=True) + ba2_ref[...]  # [1, tN]
        if needs_mask:
            scores = jnp.where(col_valid, scores, _NEG_BIG)
        # Cache scores so pass 1 skips the h@Wa1 + tanh recompute entirely.
        s_sc[:, pl.ds(start, tile_n)] = scores
        # Online softmax stats over the whole bag.
        m_old = m_sc[...]
        m_new = jnp.maximum(m_old, jnp.max(scores, axis=1, keepdims=True))
        l_sc[...] = (l_sc[...] * jnp.exp(m_old - m_new)
                     + jnp.sum(jnp.exp(scores - m_new), axis=1, keepdims=True))
        m_sc[...] = m_new

    @pl.when(p == 1)
    def _classify_pass():
        ht = ht_ref[...]                                                       # [F, tN] bf16
        scores = s_sc[:, pl.ds(start, tile_n)]                                 # [1, tN] f32
        # Exact normalization (probabilities must sum to 1); attention >= 0 by construction.
        attention = jnp.exp(scores - m_sc[...]) / l_sc[...]                    # [1, tN] f32
        hc1 = jnp.dot(wc1t_ref[...], ht, preferred_element_type=jnp.float32)   # [H, tN] f32
        # Attention applied post-matmul in f32: alpha*(h@Wc1) == (alpha*h)@Wc1 (row scaling).
        z = jnp.maximum(attention * hc1 + bc1_ref[...], 0.0)                   # [H, tN] f32
        patch_logits = (jnp.dot(wc2t_ref[...], z.astype(jnp.bfloat16),
                                preferred_element_type=jnp.float32)
                        + bc2_ref[...])                                        # [C, tN] f32

        contrib = patch_logits
        if needs_mask:
            contrib = jnp.where(col_valid, patch_logits, 0.0)
        acc_sc[...] = acc_sc[...] + jnp.sum(contrib, axis=1, keepdims=True)    # [C, 1]

        # Per-patch class softmax, written lane-dense into the VMEM-resident [C, N] output.
        pm = jnp.max(patch_logits, axis=0, keepdims=True)
        pe = jnp.exp(patch_logits - pm)
        patch_prob_ref[:, pl.ds(start, tile_n)] = pe / jnp.sum(pe, axis=0, keepdims=True)

    @pl.when(jnp.logical_and(p == 1, t == nt - 1))
    def _finalize():
        bag_logits = acc_sc[...]                                               # [C, 1]
        bag_logits_ref[...] = bag_logits
        bm = jnp.max(bag_logits, axis=0, keepdims=True)
        be = jnp.exp(bag_logits - bm)
        bag_prob_ref[...] = be / jnp.sum(be, axis=0, keepdims=True)
        # argmax over classes (first max, matching torch.topk(k=1) / argmax)
        n_cls = bag_logits.shape[0]
        idx = jax.lax.broadcasted_iota(jnp.int32, bag_logits.shape, 0)
        yhat_ref[...] = jnp.min(jnp.where(bag_logits == bm, idx, n_cls),
                                axis=0, keepdims=True).astype(jnp.int32)


def _round_up(x, m):
    return (x + m - 1) // m * m


@functools.partial(jax.jit, static_argnames=("tile_n",))
def default_mil_graph_forward(h, params, *, tile_n=None):
    """JAX/Pallas equivalent of DefaultMILGraph.forward(h).

    h: [bag_size, F] float32
    returns (bag_logits [1,C], bag_prob [1,C], Y_hat [1] int32, patch_prob.T [C, bag_size], {})
    """
    n, f = h.shape
    d = params["wa1"].shape[1]
    hdim = params["wc1"].shape[1]
    c = params["wc2"].shape[1]

    if tile_n is None:
        tile_n = min(_round_up(n, 128), 512)
    tile_n = max(128, _round_up(tile_n, 128))     # bag tiles are 128-lane aligned
    nt = (n + tile_n - 1) // tile_n
    n_pad = nt * tile_n
    needs_mask = n_pad != n

    # Transposed bf16 operands: bag axis on lanes.  h.T cast fuses into a single XLA
    # copy; no explicit padding (the kernel masks the ragged tail of the last block).
    ht = h.T.astype(jnp.bfloat16)                      # [F, N]
    wa1t = params["wa1"].T.astype(jnp.bfloat16)        # [D, F]
    wc1t = params["wc1"].T.astype(jnp.bfloat16)        # [H, F]
    wc2t = params["wc2"].T.astype(jnp.bfloat16)        # [C, H]
    ba1 = params["ba1"].reshape(d, 1)
    wa2 = params["wa2"].reshape(d, 1)
    ba2 = params["ba2"].reshape(1, 1)
    bc1 = params["bc1"].reshape(hdim, 1)
    bc2 = params["bc2"].reshape(c, 1)

    kernel = functools.partial(_mil_kernel, n_valid=n, tile_n=tile_n,
                               needs_mask=needs_mask)
    const = lambda p, t: (0, 0)

    out_shapes = (
        jax.ShapeDtypeStruct((c, 1), jnp.float32),      # bag_logits (as a column)
        jax.ShapeDtypeStruct((c, 1), jnp.float32),      # bag_prob   (as a column)
        jax.ShapeDtypeStruct((1, 1), jnp.int32),        # Y_hat
        jax.ShapeDtypeStruct((c, n_pad), jnp.float32),  # patch_prob.T (lane-dense)
    )
    bag_logits_c, bag_prob_c, yhat, patch_prob_t = pl.pallas_call(
        kernel,
        grid=(2, nt),
        in_specs=[
            pl.BlockSpec((f, tile_n), lambda p, t: (0, t)),   # h.T streamed once per pass
            pl.BlockSpec((d, f), const),                      # wa1.T   (VMEM resident)
            pl.BlockSpec((d, 1), const),                      # ba1
            pl.BlockSpec((d, 1), const),                      # wa2 (column, VPU/XLU path)
            pl.BlockSpec((1, 1), const),                      # ba2
            pl.BlockSpec((hdim, f), const),                   # wc1.T
            pl.BlockSpec((hdim, 1), const),                   # bc1
            pl.BlockSpec((c, hdim), const),                   # wc2.T
            pl.BlockSpec((c, 1), const),                      # bc2
        ],
        out_specs=(
            pl.BlockSpec((c, 1), const),                      # bag_logits
            pl.BlockSpec((c, 1), const),                      # bag_prob
            pl.BlockSpec((1, 1), const),                      # Y_hat
            pl.BlockSpec((c, n_pad), const),                  # patch_prob.T: single resident
                                                              # block, written back once
        ),
        out_shape=out_shapes,
        scratch_shapes=[
            pltpu.VMEM((1, 1), jnp.float32),      # running max of attention scores
            pltpu.VMEM((1, 1), jnp.float32),      # running softmax denominator
            pltpu.VMEM((c, 1), jnp.float32),      # bag_logits accumulator
            pltpu.VMEM((1, n_pad), jnp.float32),  # cached attention scores (pass 0 -> pass 1)
        ],
        compiler_params=pltpu.CompilerParams(
            dimension_semantics=("arbitrary", "arbitrary"),
            # Actual use is a few MB at these shapes; keep the limit generation-safe
            # (well under v7x's 64 MiB physical VMEM).
            vmem_limit_bytes=32 * 1024 * 1024),
    )(ht, wa1t, ba1, wa2, ba2, wc1t, bc1, wc2t, bc2)

    bag_logits = bag_logits_c.reshape(1, c)
    bag_prob = bag_prob_c.reshape(1, c)
    y_hat = yhat.reshape(1)
    patch_prob_t = patch_prob_t[:, :n]              # drop masked tail columns
    return bag_logits, bag_prob, y_hat, patch_prob_t, {}


def init_params(key, f, d, hdim, c):
    """Deterministic synthetic parameters (shapes implied by the module architecture)."""
    ks = jax.random.split(key, 8)
    s = 0.1
    return {
        # pointer: Linear(F, D) -> tanh -> Linear(D, 1) -> softmax over bag
        "wa1": s * jax.random.normal(ks[0], (f, d), jnp.float32),
        "ba1": 0.01 * jax.random.normal(ks[1], (1, d), jnp.float32),
        "wa2": s * jax.random.normal(ks[2], (1, d), jnp.float32),   # stored as a row vector
        "ba2": 0.01 * jax.random.normal(ks[3], (1, 1), jnp.float32),
        # classifier: Linear(F, H) -> ReLU -> Linear(H, C), applied per patch
        "wc1": s * jax.random.normal(ks[4], (f, hdim), jnp.float32),
        "bc1": 0.01 * jax.random.normal(ks[5], (1, hdim), jnp.float32),
        "wc2": s * jax.random.normal(ks[6], (hdim, c), jnp.float32),
        "bc2": 0.01 * jax.random.normal(ks[7], (1, c), jnp.float32),
    }


def _reference(h, params):
    """Pure-JAX reference with the same dtype policy as the kernel."""
    hb = h.astype(jnp.bfloat16)
    wa1 = params["wa1"].astype(jnp.bfloat16)
    wc1 = params["wc1"].astype(jnp.bfloat16)
    wc2 = params["wc2"].astype(jnp.bfloat16)
    a1 = jnp.tanh(jnp.dot(hb, wa1, preferred_element_type=jnp.float32) + params["ba1"])
    scores = jnp.sum(a1 * params["wa2"], axis=1, keepdims=True) + params["ba2"]
    attention = jax.nn.softmax(scores, axis=0)                         # [N, 1] f32
    hc1 = jnp.dot(hb, wc1, preferred_element_type=jnp.float32)
    z = jnp.maximum(attention * hc1 + params["bc1"], 0.0)              # f32 post-matmul scale
    patch_logits = jnp.dot(z.astype(jnp.bfloat16), wc2,
                           preferred_element_type=jnp.float32) + params["bc2"]
    bag_logits = jnp.sum(patch_logits, axis=0, keepdims=True)
    bag_prob = jax.nn.softmax(bag_logits, axis=1)
    patch_prob = jax.nn.softmax(patch_logits, axis=1)
    return bag_logits, bag_prob, patch_prob.T


if __name__ == "__main__":
    key = jax.random.PRNGKey(0)
    k_h, k_p = jax.random.split(key)

    # Multi-tile bag with a masked ragged tail: 200 patches, tile_n=128 -> 2 lane tiles
    # (exercises the online softmax carry, bag accumulation and the last-tile masking).
    BAG, F, D, H, C = 200, 64, 32, 64, 4
    h = jax.random.normal(k_h, (BAG, F), jnp.float32)
    params = init_params(k_p, F, D, H, C)

    outs = default_mil_graph_forward(h, params, tile_n=128)
    bag_logits, bag_prob, y_hat, patch_prob_t, extra = jax.block_until_ready(outs)

    ref_logits, ref_prob, ref_ppt = _reference(h, params)

    assert bag_logits.shape == (1, C)
    assert bag_prob.shape == (1, C)
    assert y_hat.shape == (1,)
    assert patch_prob_t.shape == (C, BAG)
    assert extra == {}

    np.testing.assert_allclose(np.asarray(bag_logits), np.asarray(ref_logits),
                               atol=5e-3, rtol=5e-3)
    np.testing.assert_allclose(np.asarray(bag_prob), np.asarray(ref_prob),
                               atol=5e-3, rtol=5e-3)
    np.testing.assert_allclose(np.asarray(patch_prob_t), np.asarray(ref_ppt),
                               atol=5e-3, rtol=5e-3)

    # probabilities are well-formed (exact normalization) and Y_hat picks the max bag class
    assert np.all(np.asarray(bag_prob) >= 0.0)
    assert abs(float(jnp.sum(bag_prob)) - 1.0) < 1e-3
    assert np.all(np.abs(np.asarray(jnp.sum(patch_prob_t, axis=0)) - 1.0) < 1e-3)
    assert 0 <= int(y_hat[0]) < C
    assert float(bag_prob[0, int(y_hat[0])]) >= float(jnp.max(bag_prob)) - 1e-6

    print("KERNEL_OK")
</pallas_src>

<mosaic_0001>
module attributes {stable_mosaic.version = 11 : i64} {
  func.func @_mil_kernel(%arg0: i32, %arg1: i32, %arg2: memref<64x128xbf16, #tpu.memory_space<vmem>>, %arg3: memref<32x64xbf16, #tpu.memory_space<vmem>>, %arg4: memref<32x1xf32, #tpu.memory_space<vmem>>, %arg5: memref<32x1xf32, #tpu.memory_space<vmem>>, %arg6: memref<1x1xf32, #tpu.memory_space<vmem>>, %arg7: memref<64x64xbf16, #tpu.memory_space<vmem>>, %arg8: memref<64x1xf32, #tpu.memory_space<vmem>>, %arg9: memref<4x64xbf16, #tpu.memory_space<vmem>>, %arg10: memref<4x1xf32, #tpu.memory_space<vmem>>, %arg11: memref<4x1xf32, #tpu.memory_space<vmem>>, %arg12: memref<4x1xf32, #tpu.memory_space<vmem>>, %arg13: memref<1x1xi32, #tpu.memory_space<vmem>>, %arg14: memref<4x256xf32, #tpu.memory_space<vmem>>, %arg15: memref<1x1xf32, #tpu.memory_space<vmem>>, %arg16: memref<1x1xf32, #tpu.memory_space<vmem>>, %arg17: memref<4x1xf32, #tpu.memory_space<vmem>>, %arg18: memref<1x256xf32, #tpu.memory_space<vmem>>) attributes {dimension_semantics = [#tpu.dimension_semantics<arbitrary>, #tpu.dimension_semantics<arbitrary>], iteration_bounds = array<i64: 2, 2>, scalar_prefetch = 0 : i64, scratch_operands = 4 : i64, tpu.core_type = #tpu.core_type<tc>, window_params = [{transform_indices = @transform_0, window_bounds = array<i64: 64, 128>}, {pipeline_mode = #tpu.pipeline_mode<synchronous>, transform_indices = @transform_1, window_bounds = array<i64: 32, 64>}, {pipeline_mode = #tpu.pipeline_mode<synchronous>, transform_indices = @transform_2, window_bounds = array<i64: 32, 1>}, {pipeline_mode = #tpu.pipeline_mode<synchronous>, transform_indices = @transform_3, window_bounds = array<i64: 32, 1>}, {pipeline_mode = #tpu.pipeline_mode<synchronous>, transform_indices = @transform_4, window_bounds = array<i64: 1, 1>}, {pipeline_mode = #tpu.pipeline_mode<synchronous>, transform_indices = @transform_5, window_bounds = array<i64: 64, 64>}, {pipeline_mode = #tpu.pipeline_mode<synchronous>, transform_indices = @transform_6, window_bounds = array<i64: 64, 1>}, {pipeline_mode = #tpu.pipeline_mode<synchronous>, transform_indices = @transform_7, window_bounds = array<i64: 4, 64>}, {pipeline_mode = #tpu.pipeline_mode<synchronous>, transform_indices = @transform_8, window_bounds = array<i64: 4, 1>}, {pipeline_mode = #tpu.pipeline_mode<synchronous>, transform_indices = @transform_9, window_bounds = array<i64: 4, 1>}, {pipeline_mode = #tpu.pipeline_mode<synchronous>, transform_indices = @transform_10, window_bounds = array<i64: 4, 1>}, {pipeline_mode = #tpu.pipeline_mode<synchronous>, transform_indices = @transform_11, window_bounds = array<i64: 1, 1>}, {pipeline_mode = #tpu.pipeline_mode<synchronous>, transform_indices = @transform_12, window_bounds = array<i64: 4, 256>}]} {
    %c128_i32 = arith.constant 128 : i32
    %0 = arith.muli %arg1, %c128_i32 : i32
    %1 = tpu.assume_multiple %0, 128 : i32
    %c128_i32_0 = arith.constant 128 : i32
    %2 = arith.muli %arg1, %c128_i32_0 : i32
    %3 = tpu.iota {dimensions = array<i32: 1>} : vector<1x128xi32>
    %4 = vector.broadcast %2 : i32 to vector<1x128xi32>
    %5 = arith.addi %4, %3 : vector<1x128xi32>
    %c200_i32 = arith.constant 200 : i32
    %6 = vector.broadcast %c200_i32 : i32 to vector<1x128xi32>
    %7 = arith.cmpi slt, %5, %6 : vector<1x128xi32>
    %c0_i32 = arith.constant 0 : i32
    %8 = arith.cmpi eq, %arg0, %c0_i32 : i32
    %c0_i32_1 = arith.constant 0 : i32
    %9 = arith.cmpi eq, %arg1, %c0_i32_1 : i32
    %10 = arith.andi %8, %9 : i1
    %11 = arith.extui %10 : i1 to i32
    %c0_i32_2 = arith.constant 0 : i32
    %12 = arith.cmpi ne, %11, %c0_i32_2 : i32
    scf.if %12 {
      %cst = arith.constant -1.000000e+30 : f32
      %24 = vector.broadcast %cst : f32 to vector<1x1xf32>
      %c0 = arith.constant 0 : index
      %c0_9 = arith.constant 0 : index
      %25 = vector.load %arg15[%c0, %c0_9] : memref<1x1xf32, #tpu.memory_space<vmem>>, vector<1x1xf32>
      tpu.vector_store %arg15[%c0, %c0_9], %24 {strides = array<i32>} : memref<1x1xf32, #tpu.memory_space<vmem>>, vector<1x1xf32>,
      %cst_10 = arith.constant 0.000000e+00 : f32
      %26 = vector.broadcast %cst_10 : f32 to vector<1x1xf32>
      %c0_11 = arith.constant 0 : index
      %c0_12 = arith.constant 0 : index
      %27 = vector.load %arg16[%c0_11, %c0_12] : memref<1x1xf32, #tpu.memory_space<vmem>>, vector<1x1xf32>
      tpu.vector_store %arg16[%c0_11, %c0_12], %26 {strides = array<i32>} : memref<1x1xf32, #tpu.memory_space<vmem>>, vector<1x1xf32>,
      %cst_13 = arith.constant 0.000000e+00 : f32
      %28 = vector.broadcast %cst_13 : f32 to vector<4x1xf32>
      %c0_14 = arith.constant 0 : index
      %c0_15 = arith.constant 0 : index
      %29 = vector.load %arg17[%c0_14, %c0_15] : memref<4x1xf32, #tpu.memory_space<vmem>>, vector<4x1xf32>
      tpu.vector_store %arg17[%c0_14, %c0_15], %28 {strides = array<i32>} : memref<4x1xf32, #tpu.memory_space<vmem>>, vector<4x1xf32>,
    } else {
    }
    %c0_i32_3 = arith.constant 0 : i32
    %13 = arith.cmpi eq, %arg0, %c0_i32_3 : i32
    %14 = arith.extui %13 : i1 to i32
    %c0_i32_4 = arith.constant 0 : i32
    %15 = arith.cmpi ne, %14, %c0_i32_4 : i32
    scf.if %15 {
      %c0 = arith.constant 0 : index
      %c0_9 = arith.constant 0 : index
      %24 = vector.load %arg2[%c0, %c0_9] : memref<64x128xbf16, #tpu.memory_space<vmem>>, vector<64x128xbf16>
      %c0_10 = arith.constant 0 : index
      %c0_11 = arith.constant 0 : index
      %25 = vector.load %arg3[%c0_10, %c0_11] : memref<32x64xbf16, #tpu.memory_space<vmem>>, vector<32x64xbf16>
      %cst = arith.constant dense<0.000000e+00> : vector<32x128xf32>
      %26 = tpu.matmul %25, %24, %cst {dimension_numbers = #tpu.dot_dimension_numbers<[1], [0], [0], [1], [0, 0, 1, 1], [], []>} : vector<32x64xbf16>, vector<64x128xbf16>, vector<32x128xf32> -> vector<32x128xf32>
      %c0_12 = arith.constant 0 : index
      %c0_13 = arith.constant 0 : index
      %27 = vector.load %arg4[%c0_12, %c0_13] : memref<32x1xf32, #tpu.memory_space<vmem>>, vector<32x1xf32>
      %28 = vector.broadcast %27 : vector<32x1xf32> to vector<32x128xf32>
      %29 = arith.addf %26, %28 : vector<32x128xf32>
      %30 = math.tanh %29 : vector<32x128xf32>
      %c0_14 = arith.constant 0 : index
      %c0_15 = arith.constant 0 : index
      %31 = vector.load %arg5[%c0_14, %c0_15] : memref<32x1xf32, #tpu.memory_space<vmem>>, vector<32x1xf32>
      %32 = vector.broadcast %31 : vector<32x1xf32> to vector<32x128xf32>
      %33 = arith.mulf %30, %32 : vector<32x128xf32>
      %cst_16 = arith.constant dense<0.000000e+00> : vector<128xf32>
      %34 = vector.multi_reduction <add>, %33, %cst_16 [0] : vector<32x128xf32> to vector<128xf32>
      %35 = vector.shape_cast %34 : vector<128xf32> to vector<1x128xf32>
      %c0_17 = arith.constant 0 : index
      %c0_18 = arith.constant 0 : index
      %36 = vector.load %arg6[%c0_17, %c0_18] : memref<1x1xf32, #tpu.memory_space<vmem>>, vector<1x1xf32>
      %37 = vector.broadcast %36 : vector<1x1xf32> to vector<1x128xf32>
      %38 = arith.addf %35, %37 : vector<1x128xf32>
      %cst_19 = arith.constant -1.000000e+30 : f32
      %39 = vector.broadcast %cst_19 : f32 to vector<1x128xf32>
      %40 = arith.select %7, %38, %39 : vector<1x128xi1>, vector<1x128xf32>
      %c0_20 = arith.constant 0 : index
      %41 = arith.index_cast %1 : i32 to index
      %42 = vector.load %arg18[%c0_20, %41] : memref<1x256xf32, #tpu.memory_space<vmem>>, vector<1x128xf32>
      tpu.vector_store %arg18[%c0_20, %41], %40 {strides = array<i32>} : memref<1x256xf32, #tpu.memory_space<vmem>>, vector<1x128xf32>,
      %c0_21 = arith.constant 0 : index
      %c0_22 = arith.constant 0 : index
      %43 = vector.load %arg15[%c0_21, %c0_22] : memref<1x1xf32, #tpu.memory_space<vmem>>, vector<1x1xf32>
      %cst_23 = arith.constant dense<0xFF800000> : vector<1xf32>
      %44 = vector.multi_reduction <maximumf>, %40, %cst_23 [1] : vector<1x128xf32> to vector<1xf32>
      %45 = vector.shape_cast %44 : vector<1xf32> to vector<1x1xf32>
      %46 = arith.maximumf %43, %45 : vector<1x1xf32>
      %c0_24 = arith.constant 0 : index
      %c0_25 = arith.constant 0 : index
      %47 = vector.load %arg16[%c0_24, %c0_25] : memref<1x1xf32, #tpu.memory_space<vmem>>, vector<1x1xf32>
      %48 = arith.subf %43, %46 : vector<1x1xf32>
      %49 = math.exp %48 : vector<1x1xf32>
      %50 = arith.mulf %47, %49 : vector<1x1xf32>
      %51 = vector.broadcast %46 : vector<1x1xf32> to vector<1x128xf32>
      %52 = arith.subf %40, %51 : vector<1x128xf32>
      %53 = math.exp %52 : vector<1x128xf32>
      %cst_26 = arith.constant dense<0.000000e+00> : vector<1xf32>
      %54 = vector.multi_reduction <add>, %53, %cst_26 [1] : vector<1x128xf32> to vector<1xf32>
      %55 = vector.shape_cast %54 : vector<1xf32> to vector<1x1xf32>
      %56 = arith.addf %50, %55 : vector<1x1xf32>
      %c0_27 = arith.constant 0 : index
      %c0_28 = arith.constant 0 : index
      %57 = vector.load %arg16[%c0_27, %c0_28] : memref<1x1xf32, #tpu.memory_space<vmem>>, vector<1x1xf32>
      tpu.vector_store %arg16[%c0_27, %c0_28], %56 {strides = array<i32>} : memref<1x1xf32, #tpu.memory_space<vmem>>, vector<1x1xf32>,
      %c0_29 = arith.constant 0 : index
      %c0_30 = arith.constant 0 : index
      %58 = vector.load %arg15[%c0_29, %c0_30] : memref<1x1xf32, #tpu.memory_space<vmem>>, vector<1x1xf32>
      tpu.vector_store %arg15[%c0_29, %c0_30], %46 {strides = array<i32>} : memref<1x1xf32, #tpu.memory_space<vmem>>, vector<1x1xf32>,
    } else {
    }
    %c1_i32 = arith.constant 1 : i32
    %16 = arith.cmpi eq, %arg0, %c1_i32 : i32
    %17 = arith.extui %16 : i1 to i32
    %c0_i32_5 = arith.constant 0 : i32
    %18 = arith.cmpi ne, %17, %c0_i32_5 : i32
    scf.if %18 {
      %c0 = arith.constant 0 : index
      %c0_9 = arith.constant 0 : index
      %24 = vector.load %arg2[%c0, %c0_9] : memref<64x128xbf16, #tpu.memory_space<vmem>>, vector<64x128xbf16>
      %c0_10 = arith.constant 0 : index
      %25 = arith.index_cast %1 : i32 to index
      %26 = vector.load %arg18[%c0_10, %25] : memref<1x256xf32, #tpu.memory_space<vmem>>, vector<1x128xf32>
      %c0_11 = arith.constant 0 : index
      %c0_12 = arith.constant 0 : index
      %27 = vector.load %arg15[%c0_11, %c0_12] : memref<1x1xf32, #tpu.memory_space<vmem>>, vector<1x1xf32>
      %28 = vector.broadcast %27 : vector<1x1xf32> to vector<1x128xf32>
      %29 = arith.subf %26, %28 : vector<1x128xf32>
      %30 = math.exp %29 : vector<1x128xf32>
      %c0_13 = arith.constant 0 : index
      %c0_14 = arith.constant 0 : index
      %31 = vector.load %arg16[%c0_13, %c0_14] : memref<1x1xf32, #tpu.memory_space<vmem>>, vector<1x1xf32>
      %32 = vector.broadcast %31 : vector<1x1xf32> to vector<1x128xf32>
      %33 = arith.divf %30, %32 : vector<1x128xf32>
      %c0_15 = arith.constant 0 : index
      %c0_16 = arith.constant 0 : index
      %34 = vector.load %arg7[%c0_15, %c0_16] : memref<64x64xbf16, #tpu.memory_space<vmem>>, vector<64x64xbf16>
      %cst = arith.constant dense<0.000000e+00> : vector<64x128xf32>
      %35 = tpu.matmul %34, %24, %cst {dimension_numbers = #tpu.dot_dimension_numbers<[1], [0], [0], [1], [0, 0, 1, 1], [], []>} : vector<64x64xbf16>, vector<64x128xbf16>, vector<64x128xf32> -> vector<64x128xf32>
      %36 = vector.broadcast %33 : vector<1x128xf32> to vector<64x128xf32>
      %37 = arith.mulf %36, %35 : vector<64x128xf32>
      %c0_17 = arith.constant 0 : index
      %c0_18 = arith.constant 0 : index
      %38 = vector.load %arg8[%c0_17, %c0_18] : memref<64x1xf32, #tpu.memory_space<vmem>>, vector<64x1xf32>
      %39 = vector.broadcast %38 : vector<64x1xf32> to vector<64x128xf32>
      %40 = arith.addf %37, %39 : vector<64x128xf32>
      %cst_19 = arith.constant 0.000000e+00 : f32
      %41 = vector.broadcast %cst_19 : f32 to vector<64x128xf32>
      %42 = arith.maximumf %40, %41 : vector<64x128xf32>
      %c0_20 = arith.constant 0 : index
      %c0_21 = arith.constant 0 : index
      %43 = vector.load %arg9[%c0_20, %c0_21] : memref<4x64xbf16, #tpu.memory_space<vmem>>, vector<4x64xbf16>
      %44 = arith.truncf %42 : vector<64x128xf32> to vector<64x128xbf16>
      %cst_22 = arith.constant dense<0.000000e+00> : vector<4x128xf32>
      %45 = tpu.matmul %43, %44, %cst_22 {dimension_numbers = #tpu.dot_dimension_numbers<[1], [0], [0], [1], [0, 0, 1, 1], [], []>} : vector<4x64xbf16>, vector<64x128xbf16>, vector<4x128xf32> -> vector<4x128xf32>
      %c0_23 = arith.constant 0 : index
      %c0_24 = arith.constant 0 : index
      %46 = vector.load %arg10[%c0_23, %c0_24] : memref<4x1xf32, #tpu.memory_space<vmem>>, vector<4x1xf32>
      %47 = vector.broadcast %46 : vector<4x1xf32> to vector<4x128xf32>
      %48 = arith.addf %45, %47 : vector<4x128xf32>
      %cst_25 = arith.constant 0.000000e+00 : f32
      %49 = vector.shape_cast %7 : vector<1x128xi1> to vector<1x128xi1>
      %50 = vector.broadcast %49 : vector<1x128xi1> to vector<4x128xi1>
      %51 = vector.broadcast %cst_25 : f32 to vector<4x128xf32>
      %52 = arith.select %50, %48, %51 : vector<4x128xi1>, vector<4x128xf32>
      %c0_26 = arith.constant 0 : index
      %c0_27 = arith.constant 0 : index
      %53 = vector.load %arg17[%c0_26, %c0_27] : memref<4x1xf32, #tpu.memory_space<vmem>>, vector<4x1xf32>
      %cst_28 = arith.constant dense<0.000000e+00> : vector<4xf32>
      %54 = vector.multi_reduction <add>, %52, %cst_28 [1] : vector<4x128xf32> to vector<4xf32>
      %55 = vector.shape_cast %54 : vector<4xf32> to vector<4x1xf32>
      %56 = arith.addf %53, %55 : vector<4x1xf32>
      %c0_29 = arith.constant 0 : index
      %c0_30 = arith.constant 0 : index
      %57 = vector.load %arg17[%c0_29, %c0_30] : memref<4x1xf32, #tpu.memory_space<vmem>>, vector<4x1xf32>
      tpu.vector_store %arg17[%c0_29, %c0_30], %56 {strides = array<i32>} : memref<4x1xf32, #tpu.memory_space<vmem>>, vector<4x1xf32>,
      %cst_31 = arith.constant dense<0xFF800000> : vector<128xf32>
      %58 = vector.multi_reduction <maximumf>, %48, %cst_31 [0] : vector<4x128xf32> to vector<128xf32>
      %59 = vector.shape_cast %58 : vector<128xf32> to vector<1x128xf32>
      %60 = vector.broadcast %59 : vector<1x128xf32> to vector<4x128xf32>
      %61 = arith.subf %48, %60 : vector<4x128xf32>
      %62 = math.exp %61 : vector<4x128xf32>
      %cst_32 = arith.constant dense<0.000000e+00> : vector<128xf32>
      %63 = vector.multi_reduction <add>, %62, %cst_32 [0] : vector<4x128xf32> to vector<128xf32>
      %64 = vector.shape_cast %63 : vector<128xf32> to vector<1x128xf32>
      %65 = vector.broadcast %64 : vector<1x128xf32> to vector<4x128xf32>
      %66 = arith.divf %62, %65 : vector<4x128xf32>
      %c0_33 = arith.constant 0 : index
      %67 = arith.index_cast %1 : i32 to index
      %68 = vector.load %arg14[%c0_33, %67] : memref<4x256xf32, #tpu.memory_space<vmem>>, vector<4x128xf32>
      tpu.vector_store %arg14[%c0_33, %67], %66 {strides = array<i32>} : memref<4x256xf32, #tpu.memory_space<vmem>>, vector<4x128xf32>,
    } else {
    }
    %c1_i32_6 = arith.constant 1 : i32
    %19 = arith.cmpi eq, %arg0, %c1_i32_6 : i32
    %c1_i32_7 = arith.constant 1 : i32
    %20 = arith.cmpi eq, %arg1, %c1_i32_7 : i32
    %21 = arith.andi %19, %20 : i1
    %22 = arith.extui %21 : i1 to i32
    %c0_i32_8 = arith.constant 0 : i32
    %23 = arith.cmpi ne, %22, %c0_i32_8 : i32
    scf.if %23 {
      %c0 = arith.constant 0 : index
      %c0_9 = arith.constant 0 : index
      %24 = vector.load %arg17[%c0, %c0_9] : memref<4x1xf32, #tpu.memory_space<vmem>>, vector<4x1xf32>
      %c0_10 = arith.constant 0 : index
      %c0_11 = arith.constant 0 : index
      %25 = vector.load %arg11[%c0_10, %c0_11] : memref<4x1xf32, #tpu.memory_space<vmem>>, vector<4x1xf32>
      tpu.vector_store %arg11[%c0_10, %c0_11], %24 {strides = array<i32>} : memref<4x1xf32, #tpu.memory_space<vmem>>, vector<4x1xf32>,
      %cst = arith.constant dense<0xFF800000> : vector<1xf32>
      %26 = vector.multi_reduction <maximumf>, %24, %cst [0] : vector<4x1xf32> to vector<1xf32>
      %27 = vector.shape_cast %26 : vector<1xf32> to vector<1x1xf32>
      %28 = vector.broadcast %27 : vector<1x1xf32> to vector<4x1xf32>
      %29 = arith.subf %24, %28 : vector<4x1xf32>
      %30 = math.exp %29 : vector<4x1xf32>
      %cst_12 = arith.constant dense<0.000000e+00> : vector<1xf32>
      %31 = vector.multi_reduction <add>, %30, %cst_12 [0] : vector<4x1xf32> to vector<1xf32>
      %32 = vector.shape_cast %31 : vector<1xf32> to vector<1x1xf32>
      %33 = vector.broadcast %32 : vector<1x1xf32> to vector<4x1xf32>
      %34 = arith.divf %30, %33 : vector<4x1xf32>
      %c0_13 = arith.constant 0 : index
      %c0_14 = arith.constant 0 : index
      %35 = vector.load %arg12[%c0_13, %c0_14] : memref<4x1xf32, #tpu.memory_space<vmem>>, vector<4x1xf32>
      tpu.vector_store %arg12[%c0_13, %c0_14], %34 {strides = array<i32>} : memref<4x1xf32, #tpu.memory_space<vmem>>, vector<4x1xf32>,
      %36 = tpu.iota {dimensions = array<i32: 0>} : vector<4x1xi32>
      %37 = vector.broadcast %27 : vector<1x1xf32> to vector<4x1xf32>
      %38 = arith.cmpf oeq, %24, %37 : vector<4x1xf32>
      %c4_i32 = arith.constant 4 : i32
      %39 = vector.broadcast %c4_i32 : i32 to vector<4x1xi32>
      %40 = arith.select %38, %36, %39 : vector<4x1xi1>, vector<4x1xi32>
      %cst_15 = arith.constant dense<2147483647> : vector<1xi32>
      %41 = vector.multi_reduction <minsi>, %40, %cst_15 [0] : vector<4x1xi32> to vector<1xi32>
      %42 = vector.shape_cast %41 : vector<1xi32> to vector<1x1xi32>
      %c0_16 = arith.constant 0 : index
      %c0_17 = arith.constant 0 : index
      %43 = vector.load %arg13[%c0_16, %c0_17] : memref<1x1xi32, #tpu.memory_space<vmem>>, vector<1x1xi32>
      tpu.vector_store %arg13[%c0_16, %c0_17], %42 {strides = array<i32>} : memref<1x1xi32, #tpu.memory_space<vmem>>, vector<1x1xi32>,
    } else {
    }
    return
  }
  func.func @transform_0(%arg0: i32, %arg1: i32) -> (i32, i32) {
    %c0_i32 = arith.constant 0 : i32
    %c0_i32_0 = arith.constant 0 : i32
    return %c0_i32, %arg1 : i32, i32
  }
  func.func @transform_1(%arg0: i32, %arg1: i32) -> (i32, i32) {
    %c0_i32 = arith.constant 0 : i32
    %c0_i32_0 = arith.constant 0 : i32
    %c0_i32_1 = arith.constant 0 : i32
    return %c0_i32, %c0_i32_0 : i32, i32
  }
  func.func @transform_2(%arg0: i32, %arg1: i32) -> (i32, i32) {
    %c0_i32 = arith.constant 0 : i32
    %c0_i32_0 = arith.constant 0 : i32
    %c0_i32_1 = arith.constant 0 : i32
    return %c0_i32, %c0_i32_0 : i32, i32
  }
  func.func @transform_3(%arg0: i32, %arg1: i32) -> (i32, i32) {
    %c0_i32 = arith.constant 0 : i32
    %c0_i32_0 = arith.constant 0 : i32
    %c0_i32_1 = arith.constant 0 : i32
    return %c0_i32, %c0_i32_0 : i32, i32
  }
  func.func @transform_4(%arg0: i32, %arg1: i32) -> (i32, i32) {
    %c0_i32 = arith.constant 0 : i32
    %c0_i32_0 = arith.constant 0 : i32
    %c0_i32_1 = arith.constant 0 : i32
    return %c0_i32, %c0_i32_0 : i32, i32
  }
  func.func @transform_5(%arg0: i32, %arg1: i32) -> (i32, i32) {
    %c0_i32 = arith.constant 0 : i32
    %c0_i32_0 = arith.constant 0 : i32
    %c0_i32_1 = arith.constant 0 : i32
    return %c0_i32, %c0_i32_0 : i32, i32
  }
  func.func @transform_6(%arg0: i32, %arg1: i32) -> (i32, i32) {
    %c0_i32 = arith.constant 0 : i32
    %c0_i32_0 = arith.constant 0 : i32
    %c0_i32_1 = arith.constant 0 : i32
    return %c0_i32, %c0_i32_0 : i32, i32
  }
  func.func @transform_7(%arg0: i32, %arg1: i32) -> (i32, i32) {
    %c0_i32 = arith.constant 0 : i32
    %c0_i32_0 = arith.constant 0 : i32
    %c0_i32_1 = arith.constant 0 : i32
    return %c0_i32, %c0_i32_0 : i32, i32
  }
  func.func @transform_8(%arg0: i32, %arg1: i32) -> (i32, i32) {
    %c0_i32 = arith.constant 0 : i32
    %c0_i32_0 = arith.constant 0 : i32
    %c0_i32_1 = arith.constant 0 : i32
    return %c0_i32, %c0_i32_0 : i32, i32
  }
  func.func @transform_9(%arg0: i32, %arg1: i32) -> (i32, i32) {
    %c0_i32 = arith.constant 0 : i32
    %c0_i32_0 = arith.constant 0 : i32
    %c0_i32_1 = arith.constant 0 : i32
    return %c0_i32, %c0_i32_0 : i32, i32
  }
  func.func @transform_10(%arg0: i32, %arg1: i32) -> (i32, i32) {
    %c0_i32 = arith.constant 0 : i32
    %c0_i32_0 = arith.constant 0 : i32
    %c0_i32_1 = arith.constant 0 : i32
    return %c0_i32, %c0_i32_0 : i32, i32
  }
  func.func @transform_11(%arg0: i32, %arg1: i32) -> (i32, i32) {
    %c0_i32 = arith.constant 0 : i32
    %c0_i32_0 = arith.constant 0 : i32
    %c0_i32_1 = arith.constant 0 : i32
    return %c0_i32, %c0_i32_0 : i32, i32
  }
  func.func @transform_12(%arg0: i32, %arg1: i32) -> (i32, i32) {
    %c0_i32 = arith.constant 0 : i32
    %c0_i32_0 = arith.constant 0 : i32
    %c0_i32_1 = arith.constant 0 : i32
    return %c0_i32, %c0_i32_0 : i32, i32
  }
}

</mosaic_0001>

<llo_original>
// kernel: default_mil_graph_forward.1
$region0: #{default_mil_graph_forward.1}
  #allocation0 [shape = 'u32[]', space=smem, size = 0x4, offset = 0x4, fixed_abs, tag = 'smem constant byte address 0x4 - core index']
  #allocation1 [shape = 'u32[144,128]{1,0:T(1,128)}', space=vmem, size = 0x12000, scoped, tag = 'internal scratch']
  #allocation2 [shape = 'f32[1,1]{1,0:T(1,128)}', space=vmem, size = 0x200, scoped, tag = 'scratch operand']
  #allocation3 [shape = 'f32[1,1]{1,0:T(1,128)}', space=vmem, size = 0x200, scoped, tag = 'scratch operand']
  #allocation4 [shape = 'f32[4,1]{1,0:T(4,128)}', space=vmem, size = 0x800, scoped, tag = 'scratch operand']
  #allocation5 [shape = 'f32[1,256]{1,0:T(1,128)}', space=vmem, size = 0x400, scoped, tag = 'scratch operand']
  #allocation6 [shape = 'f32[1,1]{1,0:T(1,128)S(1)}', space=vmem, size = 0x200, scoped, tag = 'scoped memory for default_mil_graph_forward.1']
  %s0 = inlined_call_operand.vmem [shape: bf16[64,200], index: 0, kind: input, shape index: {}]
  %s1 = inlined_call_operand.vmem [shape: bf16[32,64], index: 1, kind: input, shape index: {}]
  %s2 = inlined_call_operand.vmem [shape: f32[32,1], index: 2, kind: input, shape index: {}]
  %s3 = inlined_call_operand.vmem [shape: f32[32,1], index: 3, kind: input, shape index: {}]
  %s4 = inlined_call_operand.<no memory space> [shape: f32[1,1], index: 4, kind: input, shape index: {}]
  %s5 = inlined_call_operand.vmem [shape: bf16[64,64], index: 5, kind: input, shape index: {}]
  %s6 = inlined_call_operand.vmem [shape: f32[64,1], index: 6, kind: input, shape index: {}]
  %s7 = inlined_call_operand.vmem [shape: bf16[4,64], index: 7, kind: input, shape index: {}]
  %s8 = inlined_call_operand.vmem [shape: f32[4,1], index: 8, kind: input, shape index: {}]
  %s9 = inlined_call_operand.vmem [shape: f32[4,1], index: 9, kind: output, shape index: {0}]
  %s10 = inlined_call_operand.vmem [shape: f32[4,1], index: 10, kind: output, shape index: {1}]
  %s11 = inlined_call_operand.hbm [shape: s32[1,1], index: 11, kind: output, shape index: {2}]
  %s12 = inlined_call_operand.hbm [shape: f32[4,256], index: 12, kind: output, shape index: {3}]
  %13 = xla_tuple %s9, %s10, %s11, %s12
  %s14 = sld [smem:[#allocation0]]
  $region150: #{default_mil_graph_forward.1} parent=0
    _
  %s16 = ssub.s32 1, %s14
  %s17 = scalar_select 0, %s16, %s14
  %v18 = vstv %s4
  %19 = vst [vmem:[#allocation6] sm:$0x1] %v18
  $region1: #{default_mil_graph_forward.1} parent=0
    #allocation7 [shape = 'u8[32768]{0}', space=vmem, size = 0x8000, scoped, tag = 'input window, operand 0']
    #allocation8 [shape = 'u8[512]{0}', space=vmem, size = 0x400, scoped, tag = 'output window, operand 2, single buffered']
    #allocation9 [shape = 's32[2]{0}', space=sflag, size = 0x8, scoped, tag = 'scoped memory for default_mil_graph_forward.1']
    #allocation10 [shape = 'u8[4096]{0}', space=vmem, size = 0x1000, scoped, tag = 'output window, operand 3, single buffered']
    #allocation11 [shape = 's32[1]{0}', space=sflag, size = 0x4, scoped, tag = 'scoped memory for default_mil_graph_forward.1']
    %20 = vsyncpa [#allocation9], 0
    %21 = vsyncpa [#allocation11], 0
    loop: start=0, step=1, limit=6
    $region2: #{default_mil_graph_forward.1} parent=1 // loop_pre_header
      _
    $region3: #{default_mil_graph_forward.1} parent=1 // loop_header
      %s23 = sphi 0, %s27
      %p24 = scmp.ge.s32.totalorder %s23, 6
      %s30 = sphi 0, %s42
      %s31 = sphi 0, %s38
      %s32 = sphi 0, %s30
      %s33 = sphi 0, %s31
      %s34 = sphi 0, %s32
      %s35 = sphi 0, %s33
      %s45 = sphi 0, %s47
      %s48 = sphi 0, %s45
      %s49 = sphi 0, %s48
      %s65 = sphi 0, %s49
      %s69 = sphi 0, %s69
      %s71 = sphi 0, %s69
      %s72 = sphi 0, %s71
      %s86 = sphi 0, %s72
      %s90 = sphi 0, %s90
      %s92 = sphi 0, %s90
      %s93 = sphi 0, %s92
      %s107 = sphi 0, %s93
      %s111 = sphi 0, %s111
      %s113 = sphi 0, %s111
      %s114 = sphi 0, %s113
      %s128 = sphi 0, %s114
      %s132 = sphi 0, %s132
      %s134 = sphi 0, %s132
      %s135 = sphi 0, %s134
      %s149 = sphi 0, %s135
      %s153 = sphi 0, %s153
      %s155 = sphi 0, %s153
      %s156 = sphi 0, %s155
      %s170 = sphi 0, %s156
      %s174 = sphi 0, %s174
      %s176 = sphi 0, %s174
      %s177 = sphi 0, %s176
      %s191 = sphi 0, %s177
      %s195 = sphi 0, %s195
      %s197 = sphi 0, %s195
      %s198 = sphi 0, %s197
      %s212 = sphi 0, %s198
      %s216 = sphi 0, %s216
      %s218 = sphi 0, %s216
      %s219 = sphi 0, %s218
      %s233 = sphi 0, %s219
      %s237 = sphi 0, %s237
      %s239 = sphi 0, %s237
      %s240 = sphi 0, %s239
      %s254 = sphi 0, %s240
      %s258 = sphi 0, %s258
      %s260 = sphi 0, %s258
      %s261 = sphi 0, %s260
      %s275 = sphi 0, %s261
      %s279 = sphi 0, %s279
      %s281 = sphi 0, %s279
      %s282 = sphi 0, %s281
      %s296 = sphi 0, %s282
      %s300 = sphi 0, %s300
      %s302 = sphi 0, %s300
      %s303 = sphi 0, %s302
      %s317 = sphi 0, %s303
    $region4: #{default_mil_graph_forward.1} parent=1 // loop_header_branch
      %26 = sbr.rel (%p24) target = $region8
    $region5: #{default_mil_graph_forward.1} parent=1 // loop_body
      %s28 = ssub.s32 %s23, 1
      %s29 = ssub.s32 %s23, 2
      %s36 = sadd.s32 1, %s31
      %p37 = scmp.ge.s32.totalorder %s36, 2
      %s38 = scalar_select %p37, 0, %s36
      %s39 = sadd.s32 1, %s30
      %s40 = scalar_select %p37, %s39, %s30
      %p41 = scmp.ge.s32.totalorder %s40, 2
      %s42 = scalar_select %p41, 0, %s40
      %s43 = ssub.s32 %s31, %s38
      %p44 = scmp.eq.s32.totalorder %s43, 0
      %s46 = sadd.s32 %s45, 1
      %s47 = scalar_select %p44, %s45, %s46
      %p50 = pneg %p44
      %p51 = scmp.eq.s32.totalorder %s23, 3
      %p52 = por %p50, %p51
      %p53 = scmp.ne.s32.totalorder %s45, %s48
      %p54 = scmp.eq.s32.totalorder %s23, 0
      %p55 = por %p53, %p54
      %p56 = scmp.ne.s32.totalorder %s45, %s48
      %p57 = scmp.eq.s32.totalorder %s28, 3
      %p58 = por %p56, %p57
      %p59 = scmp.ne.s32.totalorder %s48, %s49
      %p60 = scmp.eq.s32.totalorder %s28, 0
      %p61 = por %p59, %p60
      %p62 = scmp.ne.s32.totalorder %s48, %s49
      %p63 = scmp.eq.s32.totalorder %s29, 3
      %p64 = por %p62, %p63
      %p66 = scmp.ne.s32.totalorder %s49, %s65
      %p67 = scmp.eq.s32.totalorder %s29, 0
      %p68 = por %p66, %p67
      %s70 = sadd.s32 %s69, 1
      %p73 = scmp.eq.s32.totalorder %s23, 3
      %p74 = scmp.ne.s32.totalorder %s69, %s71
      %p75 = scmp.eq.s32.totalorder %s23, 0
      %p76 = por %p74, %p75
      %p77 = scmp.ne.s32.totalorder %s69, %s71
      %p78 = scmp.eq.s32.totalorder %s28, 3
      %p79 = por %p77, %p78
      %p80 = scmp.ne.s32.totalorder %s71, %s72
      %p81 = scmp.eq.s32.totalorder %s28, 0
      %p82 = por %p80, %p81
      %p83 = scmp.ne.s32.totalorder %s71, %s72
      %p84 = scmp.eq.s32.totalorder %s29, 3
      %p85 = por %p83, %p84
      %p87 = scmp.ne.s32.totalorder %s72, %s86
      %p88 = scmp.eq.s32.totalorder %s29, 0
      %p89 = por %p87, %p88
      %s91 = sadd.s32 %s90, 1
      %p94 = scmp.eq.s32.totalorder %s23, 3
      %p95 = scmp.ne.s32.totalorder %s90, %s92
      %p96 = scmp.eq.s32.totalorder %s23, 0
      %p97 = por %p95, %p96
      %p98 = scmp.ne.s32.totalorder %s90, %s92
      %p99 = scmp.eq.s32.totalorder %s28, 3
      %p100 = por %p98, %p99
      %p101 = scmp.ne.s32.totalorder %s92, %s93
      %p102 = scmp.eq.s32.totalorder %s28, 0
      %p103 = por %p101, %p102
      %p104 = scmp.ne.s32.totalorder %s92, %s93
      %p105 = scmp.eq.s32.totalorder %s29, 3
      %p106 = por %p104, %p105
      %p108 = scmp.ne.s32.totalorder %s93, %s107
      %p109 = scmp.eq.s32.totalorder %s29, 0
      %p110 = por %p108, %p109
      %s112 = sadd.s32 %s111, 1
      %p115 = scmp.eq.s32.totalorder %s23, 3
      %p116 = scmp.ne.s32.totalorder %s111, %s113
      %p117 = scmp.eq.s32.totalorder %s23, 0
      %p118 = por %p116, %p117
      %p119 = scmp.ne.s32.totalorder %s111, %s113
      %p120 = scmp.eq.s32.totalorder %s28, 3
      %p121 = por %p119, %p120
      %p122 = scmp.ne.s32.totalorder %s113, %s114
      %p123 = scmp.eq.s32.totalorder %s28, 0
      %p124 = por %p122, %p123
      %p125 = scmp.ne.s32.totalorder %s113, %s114
      %p126 = scmp.eq.s32.totalorder %s29, 3
      %p127 = por %p125, %p126
      %p129 = scmp.ne.s32.totalorder %s114, %s128
      %p130 = scmp.eq.s32.totalorder %s29, 0
      %p131 = por %p129, %p130
      %s133 = sadd.s32 %s132, 1
      %p136 = scmp.eq.s32.totalorder %s23, 3
      %p137 = scmp.ne.s32.totalorder %s132, %s134
      %p138 = scmp.eq.s32.totalorder %s23, 0
      %p139 = por %p137, %p138
      %p140 = scmp.ne.s32.totalorder %s132, %s134
      %p141 = scmp.eq.s32.totalorder %s28, 3
      %p142 = por %p140, %p141
      %p143 = scmp.ne.s32.totalorder %s134, %s135
      %p144 = scmp.eq.s32.totalorder %s28, 0
      %p145 = por %p143, %p144
      %p146 = scmp.ne.s32.totalorder %s134, %s135
      %p147 = scmp.eq.s32.totalorder %s29, 3
      %p148 = por %p146, %p147
      %p150 = scmp.ne.s32.totalorder %s135, %s149
      %p151 = scmp.eq.s32.totalorder %s29, 0
      %p152 = por %p150, %p151
      %s154 = sadd.s32 %s153, 1
      %p157 = scmp.eq.s32.totalorder %s23, 3
      %p158 = scmp.ne.s32.totalorder %s153, %s155
      %p159 = scmp.eq.s32.totalorder %s23, 0
      %p160 = por %p158, %p159
      %p161 = scmp.ne.s32.totalorder %s153, %s155
      %p162 = scmp.eq.s32.totalorder %s28, 3
      %p163 = por %p161, %p162
      %p164 = scmp.ne.s32.totalorder %s155, %s156
      %p165 = scmp.eq.s32.totalorder %s28, 0
      %p166 = por %p164, %p165
      %p167 = scmp.ne.s32.totalorder %s155, %s156
      %p168 = scmp.eq.s32.totalorder %s29, 3
      %p169 = por %p167, %p168
      %p171 = scmp.ne.s32.totalorder %s156, %s170
      %p172 = scmp.eq.s32.totalorder %s29, 0
      %p173 = por %p171, %p172
      %s175 = sadd.s32 %s174, 1
      %p178 = scmp.eq.s32.totalorder %s23, 3
      %p179 = scmp.ne.s32.totalorder %s174, %s176
      %p180 = scmp.eq.s32.totalorder %s23, 0
      %p181 = por %p179, %p180
      %p182 = scmp.ne.s32.totalorder %s174, %s176
      %p183 = scmp.eq.s32.totalorder %s28, 3
      %p184 = por %p182, %p183
      %p185 = scmp.ne.s32.totalorder %s176, %s177
      %p186 = scmp.eq.s32.totalorder %s28, 0
      %p187 = por %p185, %p186
      %p188 = scmp.ne.s32.totalorder %s176, %s177
      %p189 = scmp.eq.s32.totalorder %s29, 3
      %p190 = por %p188, %p189
      %p192 = scmp.ne.s32.totalorder %s177, %s191
      %p193 = scmp.eq.s32.totalorder %s29, 0
      %p194 = por %p192, %p193
      %s196 = sadd.s32 %s195, 1
      %p199 = scmp.eq.s32.totalorder %s23, 3
      %p200 = scmp.ne.s32.totalorder %s195, %s197
      %p201 = scmp.eq.s32.totalorder %s23, 0
      %p202 = por %p200, %p201
      %p203 = scmp.ne.s32.totalorder %s195, %s197
      %p204 = scmp.eq.s32.totalorder %s28, 3
      %p205 = por %p203, %p204
      %p206 = scmp.ne.s32.totalorder %s197, %s198
      %p207 = scmp.eq.s32.totalorder %s28, 0
      %p208 = por %p206, %p207
      %p209 = scmp.ne.s32.totalorder %s197, %s198
      %p210 = scmp.eq.s32.totalorder %s29, 3
      %p211 = por %p209, %p210
      %p213 = scmp.ne.s32.totalorder %s198, %s212
      %p214 = scmp.eq.s32.totalorder %s29, 0
      %p215 = por %p213, %p214
      %s217 = sadd.s32 %s216, 1
      %p220 = scmp.eq.s32.totalorder %s23, 3
      %p221 = scmp.ne.s32.totalorder %s216, %s218
      %p222 = scmp.eq.s32.totalorder %s23, 0
      %p223 = por %p221, %p222
      %p224 = scmp.ne.s32.totalorder %s216, %s218
      %p225 = scmp.eq.s32.totalorder %s28, 3
      %p226 = por %p224, %p225
      %p227 = scmp.ne.s32.totalorder %s218, %s219
      %p228 = scmp.eq.s32.totalorder %s28, 0
      %p229 = por %p227, %p228
      %p230 = scmp.ne.s32.totalorder %s218, %s219
      %p231 = scmp.eq.s32.totalorder %s29, 3
      %p232 = por %p230, %p231
      %p234 = scmp.ne.s32.totalorder %s219, %s233
      %p235 = scmp.eq.s32.totalorder %s29, 0
      %p236 = por %p234, %p235
      %s238 = sadd.s32 %s237, 1
      %p241 = scmp.eq.s32.totalorder %s23, 3
      %p242 = scmp.ne.s32.totalorder %s237, %s239
      %p243 = scmp.eq.s32.totalorder %s23, 0
      %p244 = por %p242, %p243
      %p245 = scmp.ne.s32.totalorder %s237, %s239
      %p246 = scmp.eq.s32.totalorder %s28, 3
      %p247 = por %p245, %p246
      %p248 = scmp.ne.s32.totalorder %s239, %s240
      %p249 = scmp.eq.s32.totalorder %s28, 0
      %p250 = por %p248, %p249
      %p251 = scmp.ne.s32.totalorder %s239, %s240
      %p252 = scmp.eq.s32.totalorder %s29, 3
      %p253 = por %p251, %p252
      %p255 = scmp.ne.s32.totalorder %s240, %s254
      %p256 = scmp.eq.s32.totalorder %s29, 0
      %p257 = por %p255, %p256
      %s259 = sadd.s32 %s258, 1
      %p262 = scmp.eq.s32.totalorder %s23, 3
      %p263 = scmp.ne.s32.totalorder %s258, %s260
      %p264 = scmp.eq.s32.totalorder %s23, 0
      %p265 = por %p263, %p264
      %p266 = scmp.ne.s32.totalorder %s258, %s260
      %p267 = scmp.eq.s32.totalorder %s28, 3
      %p268 = por %p266, %p267
      %p269 = scmp.ne.s32.totalorder %s260, %s261
      %p270 = scmp.eq.s32.totalorder %s28, 0
      %p271 = por %p269, %p270
      %p272 = scmp.ne.s32.totalorder %s260, %s261
      %p273 = scmp.eq.s32.totalorder %s29, 3
      %p274 = por %p272, %p273
      %p276 = scmp.ne.s32.totalorder %s261, %s275
      %p277 = scmp.eq.s32.totalorder %s29, 0
      %p278 = por %p276, %p277
      %s280 = sadd.s32 %s279, 1
      %p283 = scmp.eq.s32.totalorder %s23, 3
      %p284 = scmp.ne.s32.totalorder %s279, %s281
      %p285 = scmp.eq.s32.totalorder %s23, 0
      %p286 = por %p284, %p285
      %p287 = scmp.ne.s32.totalorder %s279, %s281
      %p288 = scmp.eq.s32.totalorder %s28, 3
      %p289 = por %p287, %p288
      %p290 = scmp.ne.s32.totalorder %s281, %s282
      %p291 = scmp.eq.s32.totalorder %s28, 0
      %p292 = por %p290, %p291
      %p293 = scmp.ne.s32.totalorder %s281, %s282
      %p294 = scmp.eq.s32.totalorder %s29, 3
      %p295 = por %p293, %p294
      %p297 = scmp.ne.s32.totalorder %s282, %s296
      %p298 = scmp.eq.s32.totalorder %s29, 0
      %p299 = por %p297, %p298
      %s301 = sadd.s32 %s300, 1
      %p304 = scmp.eq.s32.totalorder %s23, 3
      %p305 = scmp.ne.s32.totalorder %s300, %s302
      %p306 = scmp.eq.s32.totalorder %s23, 0
      %p307 = por %p305, %p306
      %p308 = scmp.ne.s32.totalorder %s300, %s302
      %p309 = scmp.eq.s32.totalorder %s28, 3
      %p310 = por %p308, %p309
      %p311 = scmp.ne.s32.totalorder %s302, %s303
      %p312 = scmp.eq.s32.totalorder %s28, 0
      %p313 = por %p311, %p312
      %p314 = scmp.ne.s32.totalorder %s302, %s303
      %p315 = scmp.eq.s32.totalorder %s29, 3
      %p316 = por %p314, %p315
      %p318 = scmp.ne.s32.totalorder %s303, %s317
      %p319 = scmp.eq.s32.totalorder %s29, 0
      %p320 = por %p318, %p319
      %p321 = scmp.le.s32.totalorder 1, %s23
      %p322 = scmp.lt.s32.totalorder %s23, 5
      %p323 = pnand %p321, %p322
      %p324 = pneg %p323
      // Predicated region
      $region9: #{default_mil_graph_forward.1} parent=5 // pred_check
        _
      $region10: #{default_mil_graph_forward.1} parent=5 // pred_check_branch
        %326 = sbr.rel (%p323) target = $region12
      $region11: #{default_mil_graph_forward.1} parent=5 // pred_region
        %s327 = ssub.s32 %s23, 1
        // Predicated region
        $region13: #{default_mil_graph_forward.1} parent=11 // pred_check
          %p328 = pneg %p82
        $region14: #{default_mil_graph_forward.1} parent=11 // pred_check_branch
          %330 = sbr.rel (%p328) target = $region16
        $region15: #{default_mil_graph_forward.1} parent=11 // pred_region
          _
        $region16: #{default_mil_graph_forward.1} parent=11 // pred_fallthru
          _
        // Predicated region
        $region17: #{default_mil_graph_forward.1} parent=11 // pred_check
          %p331 = pneg %p103
        $region18: #{default_mil_graph_forward.1} parent=11 // pred_check_branch
          %333 = sbr.rel (%p331) target = $region20
        $region19: #{default_mil_graph_forward.1} parent=11 // pred_region
          _
        $region20: #{default_mil_graph_forward.1} parent=11 // pred_fallthru
          _
        // Predicated region
        $region21: #{default_mil_graph_forward.1} parent=11 // pred_check
          %p334 = pneg %p124
        $region22: #{default_mil_graph_forward.1} parent=11 // pred_check_branch
          %336 = sbr.rel (%p334) target = $region24
        $region23: #{default_mil_graph_forward.1} parent=11 // pred_region
          _
        $region24: #{default_mil_graph_forward.1} parent=11 // pred_fallthru
          _
        // Predicated region
        $region25: #{default_mil_graph_forward.1} parent=11 // pred_check
          %p337 = pneg %p145
        $region26: #{default_mil_graph_forward.1} parent=11 // pred_check_branch
          %339 = sbr.rel (%p337) target = $region28
        $region27: #{default_mil_graph_forward.1} parent=11 // pred_region
          _
        $region28: #{default_mil_graph_forward.1} parent=11 // pred_fallthru
          _
        // Predicated region
        $region29: #{default_mil_graph_forward.1} parent=11 // pred_check
          %p340 = pneg %p166
        $region30: #{default_mil_graph_forward.1} parent=11 // pred_check_branch
          %342 = sbr.rel (%p340) target = $region32
        $region31: #{default_mil_graph_forward.1} parent=11 // pred_region
          _
        $region32: #{default_mil_graph_forward.1} parent=11 // pred_fallthru
          _
        // Predicated region
        $region33: #{default_mil_graph_forward.1} parent=11 // pred_check
          %p343 = pneg %p187
        $region34: #{default_mil_graph_forward.1} parent=11 // pred_check_branch
          %345 = sbr.rel (%p343) target = $region36
        $region35: #{default_mil_graph_forward.1} parent=11 // pred_region
          _
        $region36: #{default_mil_graph_forward.1} parent=11 // pred_fallthru
          _
        // Predicated region
        $region37: #{default_mil_graph_forward.1} parent=11 // pred_check
          %p346 = pneg %p208
        $region38: #{default_mil_graph_forward.1} parent=11 // pred_check_branch
          %348 = sbr.rel (%p346) target = $region40
        $region39: #{default_mil_graph_forward.1} parent=11 // pred_region
          _
        $region40: #{default_mil_graph_forward.1} parent=11 // pred_fallthru
          _
        // Predicated region
        $region41: #{default_mil_graph_forward.1} parent=11 // pred_check
          %p349 = pneg %p229
        $region42: #{default_mil_graph_forward.1} parent=11 // pred_check_branch
          %351 = sbr.rel (%p349) target = $region44
        $region43: #{default_mil_graph_forward.1} parent=11 // pred_region
          _
        $region44: #{default_mil_graph_forward.1} parent=11 // pred_fallthru
          _
      $region12: #{default_mil_graph_forward.1} parent=5 // pred_fallthru
        _
      %p352 = scmp.lt.s32.totalorder %s23, 4
      // Predicated region
      $region45: #{default_mil_graph_forward.1} parent=5 // pred_check
        %p353 = pneg %p352
      $region46: #{default_mil_graph_forward.1} parent=5 // pred_check_branch
        %355 = sbr.rel (%p353) target = $region48
      $region47: #{default_mil_graph_forward.1} parent=5 // pred_region
        // Predicated region
        $region49: #{default_mil_graph_forward.1} parent=47 // pred_check
          %p356 = pneg %p55
        $region50: #{default_mil_graph_forward.1} parent=47 // pred_check_branch
          %358 = sbr.rel (%p356) target = $region52
        $region51: #{default_mil_graph_forward.1} parent=47 // pred_region
          %s359 = sand.u32 %s45, 1
          %s360 = sand.u32 %s45, 1
          %s361 = smul.addr %s360, 32
          %s362 = scalar_lea.vmem [#allocation7], %s361
          %s363 = smul.addr %s31, 4
          %s364 = scalar_lea.vmem %s0, %s363
          // Predicated region
          $region53: #{default_mil_graph_forward.1} parent=51 // pred_check
            _
          $region54: #{default_mil_graph_forward.1} parent=51 // pred_check_branch
            %366 = sbr.rel (0) target = $region56
          $region55: #{default_mil_graph_forward.1} parent=51 // pred_region
            // Predicated region
            $region57: #{default_mil_graph_forward.1} parent=55 // pred_check
              _
            $region58: #{default_mil_graph_forward.1} parent=55 // pred_check_branch
              %368 = sbr.rel target = $region60
            $region59: #{default_mil_graph_forward.1} parent=55 // pred_region
              // Predicated region
              $region72: #{default_mil_graph_forward.1} parent=59 // pred_check
                _
              $region73: #{default_mil_graph_forward.1} parent=59 // pred_check_branch
                %397 = sbr.rel (0) target = $region75
              $region74: #{default_mil_graph_forward.1} parent=59 // pred_region
                loop: start=0, step=1, limit=1
                $region76: #{default_mil_graph_forward.1} parent=74 // loop_pre_header
                  _
                $region77: #{default_mil_graph_forward.1} parent=74 // loop_header
                  %s399 = sphi 0, %s403
                  %p400 = scmp.ge.s32.totalorder %s399, 1
                  %s404 = sphi %s364, %s364
                  %s405 = sphi %s362, %s362
                $region78: #{default_mil_graph_forward.1} parent=74 // loop_header_branch
                  %402 = sbr.rel (%p400) target = $region82
                $region79: #{default_mil_graph_forward.1} parent=74 // loop_body
                  _
                $region80: #{default_mil_graph_forward.1} parent=74 // loop_footer
                  %s403 = sadd.s32 1, %s399
                $region81: #{default_mil_graph_forward.1} parent=74 // loop_footer_branch
                  %398 = sbr.rel target = $region77
                $region82: #{default_mil_graph_forward.1} parent=74 // loop_exit
                  _
                loop: start=0, step=1, limit=1
                $region83: #{default_mil_graph_forward.1} parent=74 // loop_pre_header
                  _
                $region84: #{default_mil_graph_forward.1} parent=74 // loop_header
                  %s408 = sphi 0, %s412
                  %p409 = scmp.ge.s32.totalorder %s408, 1
                  %s413 = sphi %s364, %s364
                  %s414 = sphi %s362, %s362
                $region85: #{default_mil_graph_forward.1} parent=74 // loop_header_branch
                  %411 = sbr.rel (%p409) target = $region89
                $region86: #{default_mil_graph_forward.1} parent=74 // loop_body
                  %v415 = vld [vmem:[%s413] sm:$0xf]
                  %416 = vst [vmem:[%s414] sm:$0xf] %v415
                  %v417 = vld [vmem:[%s413 + $0x8] sm:$0xf]
                  %418 = vst [vmem:[%s414 + $0x4] sm:$0xf] %v417
                  %v419 = vld [vmem:[%s413 + $0x10] sm:$0xf]
                  %420 = vst [vmem:[%s414 + $0x8] sm:$0xf] %v419
                  %v421 = vld [vmem:[%s413 + $0x18] sm:$0xf]
                  %422 = vst [vmem:[%s414 + $0xc] sm:$0xf] %v421
                  %v423 = vld [vmem:[%s413 + $0x20] sm:$0xf]
                  %424 = vst [vmem:[%s414 + $0x10] sm:$0xf] %v423
                  %v425 = vld [vmem:[%s413 + $0x28] sm:$0xf]
                  %426 = vst [vmem:[%s414 + $0x14] sm:$0xf] %v425
                  %v427 = vld [vmem:[%s413 + $0x30] sm:$0xf]
                  %428 = vst [vmem:[%s414 + $0x18] sm:$0xf] %v427
                  %v429 = vld [vmem:[%s413 + $0x38] sm:$0xf]
                  %430 = vst [vmem:[%s414 + $0x1c] sm:$0xf] %v429
                $region87: #{default_mil_graph_forward.1} parent=74 // loop_footer
                  %s412 = sadd.s32 1, %s408
                $region88: #{default_mil_graph_forward.1} parent=74 // loop_footer_branch
                  %407 = sbr.rel target = $region84
                $region89: #{default_mil_graph_forward.1} parent=74 // loop_exit
                  _
              $region75: #{default_mil_graph_forward.1} parent=59 // pred_fallthru
                _
            $region60: #{default_mil_graph_forward.1} parent=55 // pred_fallthru
              _
            // Predicated region
            $region61: #{default_mil_graph_forward.1} parent=55 // pred_check
              _
            $region62: #{default_mil_graph_forward.1} parent=55 // pred_check_branch
              %370 = sbr.rel (0) target = $region64
            $region63: #{default_mil_graph_forward.1} parent=55 // pred_region
              loop: start=0, step=1, limit=1
              $region65: #{default_mil_graph_forward.1} parent=63 // loop_pre_header
                _
              $region66: #{default_mil_graph_forward.1} parent=63 // loop_header
                %s373 = sphi 0, %s377
                %p374 = scmp.ge.s32.totalorder %s373, 1
                %s378 = sphi %s364, %s364
                %s379 = sphi %s362, %s362
              $region67: #{default_mil_graph_forward.1} parent=63 // loop_header_branch
                %376 = sbr.rel (%p374) target = $region71
              $region68: #{default_mil_graph_forward.1} parent=63 // loop_body
                %v380 = vld [vmem:[%s378] sm:$0xf]
                %381 = vst [vmem:[%s379] sm:$0xf] %v380
                %v382 = vld [vmem:[%s378 + $0x8] sm:$0xf]
                %383 = vst [vmem:[%s379 + $0x4] sm:$0xf] %v382
                %v384 = vld [vmem:[%s378 + $0x10] sm:$0xf]
                %385 = vst [vmem:[%s379 + $0x8] sm:$0xf] %v384
                %v386 = vld [vmem:[%s378 + $0x18] sm:$0xf]
                %387 = vst [vmem:[%s379 + $0xc] sm:$0xf] %v386
                %v388 = vld [vmem:[%s378 + $0x20] sm:$0xf]
                %389 = vst [vmem:[%s379 + $0x10] sm:$0xf] %v388
                %v390 = vld [vmem:[%s378 + $0x28] sm:$0xf]
                %391 = vst [vmem:[%s379 + $0x14] sm:$0xf] %v390
                %v392 = vld [vmem:[%s378 + $0x30] sm:$0xf]
                %393 = vst [vmem:[%s379 + $0x18] sm:$0xf] %v392
                %v394 = vld [vmem:[%s378 + $0x38] sm:$0xf]
                %395 = vst [vmem:[%s379 + $0x1c] sm:$0xf] %v394
              $region69: #{default_mil_graph_forward.1} parent=63 // loop_footer
                %s377 = sadd.s32 1, %s373
              $region70: #{default_mil_graph_forward.1} parent=63 // loop_footer_branch
                %372 = sbr.rel target = $region66
              $region71: #{default_mil_graph_forward.1} parent=63 // loop_exit
                _
            $region64: #{default_mil_graph_forward.1} parent=55 // pred_fallthru
              _
          $region56: #{default_mil_graph_forward.1} parent=51 // pred_fallthru
            _
          %431 = vnop
        $region52: #{default_mil_graph_forward.1} parent=47 // pred_fallthru
          _
      $region48: #{default_mil_graph_forward.1} parent=5 // pred_fallthru
        _
      %p432 = scmp.le.s32.totalorder 1, %s23
      %p433 = scmp.lt.s32.totalorder %s23, 5
      %p434 = pnand %p432, %p433
      %p435 = pneg %p434
      // Predicated region
      $region90: #{default_mil_graph_forward.1} parent=5 // pred_check
        _
      $region91: #{default_mil_graph_forward.1} parent=5 // pred_check_branch
        %437 = sbr.rel (%p434) target = $region93
      $region92: #{default_mil_graph_forward.1} parent=5 // pred_region
        %s438 = ssub.s32 %s23, 1
        %s439 = sand.u32 %s48, 1
        %s440 = sand.u32 %s48, 1
        %s441 = smul.addr %s440, 32
        %s442 = scalar_lea.vmem [#allocation7], %s441
        // Predicated region
        $region94: #{default_mil_graph_forward.1} parent=92 // pred_check
          %p443 = pneg %p61
        $region95: #{default_mil_graph_forward.1} parent=92 // pred_check_branch
          %445 = sbr.rel (%p443) target = $region97
        $region96: #{default_mil_graph_forward.1} parent=92 // pred_region
          _
        $region97: #{default_mil_graph_forward.1} parent=92 // pred_fallthru
          _
        %s446 = sand.u32 %s48, 1
        %s447 = sand.u32 %s48, 1
        %s448 = smul.addr %s447, 32
        %s449 = scalar_lea.vmem [#allocation7], %s448
        %p450 = pneg %p61
        %p451 = pneg %p58
        %p452 = pneg %p82
        %p453 = pneg %p79
        %p454 = pneg %p103
        %p455 = pneg %p100
        %p456 = pneg %p124
        %p457 = pneg %p121
        %p458 = pneg %p145
        %p459 = pneg %p142
        %p460 = pneg %p166
        %p461 = pneg %p163
        %p462 = pneg %p187
        %p463 = pneg %p184
        %p464 = pneg %p208
        %p465 = pneg %p205
        %p466 = pneg %p229
        %p467 = pneg %p226
        %p468 = pneg %p250
        %p469 = pneg %p247
        %p470 = pneg %p271
        %p471 = pneg %p268
        %p472 = pneg %p292
        %p473 = pneg %p289
        %p474 = pneg %p313
        %p475 = pneg %p310
        %s477 = smul.u32 %s33, 128
        %v478 = vlaneseq
        %v479 = vand.u32 %v478, 127
        %v480 = vstv %s477
        %v481 = vadd.s32 %v480, %v479
        %vm482 = vcmp.lt.s32.totalorder %v481, 200
        %p483 = scmp.eq.s32.totalorder %s32, 0
        %p484 = scmp.eq.s32.totalorder %s33, 0
        %p485 = pnand %p483, %p484
        %p486 = pneg %p485
        // Predicated region
        $region98: #{default_mil_graph_forward.1} parent=92 // pred_check
          _
        $region99: #{default_mil_graph_forward.1} parent=92 // pred_check_branch
          %488 = sbr.rel (%p485) target = $region101
        $region100: #{default_mil_graph_forward.1} parent=92 // pred_region
          %vm489 = vcmask 0
          %490 = vst.msk [vmem:[#allocation2] sm:$0x1] %vm489, -1e+30
          %491 = vst.msk [vmem:[#allocation3] sm:$0x1] %vm489, 0.0
          %vm492 = vcmask 3072
          %493 = vst.msk [vmem:[#allocation4] sm:$0xf] %vm492, 0.0
        $region101: #{default_mil_graph_forward.1} parent=92 // pred_fallthru
          _
        // Predicated region
        $region102: #{default_mil_graph_forward.1} parent=92 // pred_check
          %p494 = pneg %p483
        $region103: #{default_mil_graph_forward.1} parent=92 // pred_check_branch
          %496 = sbr.rel (%p494) target = $region105
        $region104: #{default_mil_graph_forward.1} parent=92 // pred_region
          %v497 = vld [vmem:[%s442] sm:$0xf]
          %v498 = vld [vmem:[%s442 + $0x4] sm:$0xf]
          %v499 = vld [vmem:[%s442 + $0x8] sm:$0xf]
          %v500 = vld [vmem:[%s442 + $0xc] sm:$0xf]
          %v501 = vld [vmem:[%s442 + $0x10] sm:$0xf]
          %v502 = vld [vmem:[%s442 + $0x14] sm:$0xf]
          %v503 = vld [vmem:[%s442 + $0x18] sm:$0xf]
          %v504 = vld [vmem:[%s442 + $0x1c] sm:$0xf]
          %v505 = vld [vmem:[%s1] sm:$0xf]
          %v506 = vld [vmem:[%s1 + $0x4] sm:$0xf]
          %v507 = vld [vmem:[%s1 + $0x8] sm:$0xf]
          %v508 = vld [vmem:[%s1 + $0xc] sm:$0xf]
          %v509 = vld [vmem:[%s2] sm:$0xff]
          %v510 = vld [vmem:[%s2 + $0x8] sm:$0xff]
          %v511 = vld [vmem:[%s2 + $0x10] sm:$0xff]
          %v512 = vld [vmem:[%s2 + $0x18] sm:$0xff]
          %514 = vset.pattern.permute.xlu0 0
          %515 = vperm.xlu0 %514, %v509
          %v516 = vpop.permute.xlu0 %515
          %519 = vset.pattern.permute.xlu0 0
          %520 = vperm.xlu0 %519, %v510
          %v521 = vpop.permute.xlu0 %520
          %524 = vset.pattern.permute.xlu0 0
          %525 = vperm.xlu0 %524, %v511
          %v526 = vpop.permute.xlu0 %525
          %529 = vset.pattern.permute.xlu0 0
          %530 = vperm.xlu0 %529, %v512
          %v531 = vpop.permute.xlu0 %530
          %v537 = vunpack.c.l.b16 %v505
          %v538 = vunpack.c.l.b16 %v506
          %v539 = vunpack.c.l.b16 %v507
          %v540 = vunpack.c.l.b16 %v508
          %v541 = vpack.c.b16 %v538, %v537
          %v542 = vpack.c.b16 %v540, %v539
          %v551 = vunpack.c.l.b16 %v497
          %v552 = vunpack.c.l.b16 %v498
          %v553 = vunpack.c.l.b16 %v499
          %v554 = vunpack.c.l.b16 %v500
          %v555 = vunpack.c.l.b16 %v501
          %v556 = vunpack.c.l.b16 %v502
          %v557 = vunpack.c.l.b16 %v503
          %v558 = vunpack.c.l.b16 %v504
          %v559 = vpack.c.b16 %v552, %v551
          %v560 = vpack.c.b16 %v554, %v553
          %v561 = vpack.c.b16 %v556, %v555
          %v562 = vpack.c.b16 %v558, %v557
          %vm567 = vcmask 523264
          %v569 = vsel %vm567, %v541, 0
          %v572 = vsel %vm567, %v542, 0
          %574 = vmatprep.subr.bf16.mxu0 0
          %575 = vmatpush1.bf16.msra.mxu0 %v559
          %576 = vmatprep.subr.bf16.mxu0 0
          %577 = vmatpush1.bf16.msra.mxu0 %v560
          %578 = vmatprep.subr.bf16.mxu0 0
          %579 = vmatpush1.bf16.msra.mxu0 %v561
          %580 = vmatprep.subr.bf16.mxu0 0
          %581 = vmatpush1.bf16.msra.mxu0 %v562
          %582 = vmatprep.subr.bf16.mxu0 0
          %583 = vmatpush1.bf16.msra.mxu0 0
          %584 = vmatprep.subr.bf16.mxu0 0
          %585 = vmatpush1.bf16.msra.mxu0 0
          %586 = vmatprep.subr.bf16.mxu0 0
          %587 = vmatpush1.bf16.msra.mxu0 0
          %588 = vmatprep.subr.bf16.mxu0 0
          %589 = vmatpush1.bf16.msra.mxu0 0
          %590 = vmatprep.subr.bf16.mxu0 0
          %591 = vmatpush1.bf16.msra.mxu0 0
          %592 = vmatprep.subr.bf16.mxu0 0
          %593 = vmatpush1.bf16.msra.mxu0 0
          %594 = vmatprep.subr.bf16.mxu0 0
          %595 = vmatpush1.bf16.msra.mxu0 0
          %596 = vmatprep.subr.bf16.mxu0 0
          %597 = vmatpush1.bf16.msra.mxu0 0
          %598 = vmatprep.subr.bf16.mxu0 0
          %599 = vmatpush1.bf16.msra.mxu0 0
          %600 = vmatprep.subr.bf16.mxu0 0
          %601 = vmatpush1.bf16.msra.mxu0 0
          %602 = vmatprep.subr.bf16.mxu0 0
          %603 = vmatpush1.bf16.msra.mxu0 0
          %604 = vmatprep.subr.bf16.mxu0 0
          %605 = vmatpush1.bf16.msra.mxu0 0
          %606 = vmatprep.mubr.bf16.mxu0 0
          %607 = vmatmul.mubr.bf16.gmra.mrb[0].mxu0 %v569
          %v608 = vpop.f32.mrb[0].mxu0
          %v609 = vadd.f32 %v516, %v608
          %v610 = vpop.f32.mrb[0].mxu0
          %v611 = vpop.f32.mrb[0].mxu0
          %v612 = vadd.f32 %v521, %v611
          %v613 = vpop.f32.mrb[0].mxu0
          %614 = vmatprep.mubr.bf16.mxu0 0
          %615 = vmatmul.mubr.bf16.gmra.mrb[0].mxu0 %v572
          %v616 = vpop.f32.mrb[0].mxu0
          %v617 = vadd.f32 %v526, %v616
          %v618 = vpop.f32.mrb[0].mxu0
          %v619 = vpop.f32.mrb[0].mxu0
          %v620 = vadd.f32 %v531, %v619
          %v621 = vpop.f32.mrb[0].mxu0
          %622 = vdwg.mxu0
          %v623 = vtanh.pop %v609
          %v624 = vtanh.pop %v612
          %v625 = vtanh.pop %v617
          %v626 = vtanh.pop %v620
          %v627 = vld [vmem:[%s3] sm:$0xff]
          %v628 = vld [vmem:[%s3 + $0x8] sm:$0xff]
          %v629 = vld [vmem:[%s3 + $0x10] sm:$0xff]
          %v630 = vld [vmem:[%s3 + $0x18] sm:$0xff]
          %632 = vset.pattern.permute.xlu0 0
          %633 = vperm.xlu0 %632, %v627
          %v634 = vpop.permute.xlu0 %633
          %637 = vset.pattern.permute.xlu0 0
          %638 = vperm.xlu0 %637, %v628
          %v639 = vpop.permute.xlu0 %638
          %642 = vset.pattern.permute.xlu0 0
          %643 = vperm.xlu0 %642, %v629
          %v644 = vpop.permute.xlu0 %643
          %647 = vset.pattern.permute.xlu0 0
          %648 = vperm.xlu0 %647, %v630
          %v649 = vpop.permute.xlu0 %648
          %v651 = vmul.f32 %v623, %v634
          %v652 = vmul.f32 %v624, %v639
          %v653 = vmul.f32 %v625, %v644
          %v654 = vmul.f32 %v626, %v649
          %v655 = vadd.f32 %v651, %v652
          %v656 = vadd.f32 %v655, %v653
          %v657 = vadd.f32 %v656, %v654
          %v658 = vrot.slane %v657, 4
          %v659 = vadd.f32 %v657, %v658
          %v660 = vrot.slane %v659, 2
          %v661 = vadd.f32 %v659, %v660
          %v662 = vrot.slane %v661, 1
          %v663 = vadd.f32 %v661, %v662
          %v664 = vld [vmem:[#allocation6] sm:$0x1]
          %666 = vset.pattern.permute.xlu0 0
          %667 = vperm.xlu0 %666, %v664
          %v668 = vpop.permute.xlu0 %667
          %v670 = vlaneseq
          %v671 = vshrl.u32 %v670, 7
          %v672 = vsub.s32 0, %v671
          %v673 = vrot.slane %v668, %v672
          %v674 = vadd.f32 %v663, %v673
          %v675 = vsel %vm482, %v674, -1e+30
          %s676 = sshra.s32 %s477, 7
          %s677 = sand.u32 %s477, 127
          %s678 = scalar_lea.vmem [#allocation5], %s676
          %v679 = vlaneseq
          %vm680 = vcmp.ge.s32.totalorder %v679, 0
          %vm681 = vcmp.lt.s32.totalorder %v679, 128
          %vm682 = vmand %vm680, %vm681
          %683 = vst.msk [vmem:[%s678] sm:$0x1] %vm682, %v675
          %v684 = vld [vmem:[#allocation2] sm:$0x1]
          %685 = vmax.xlane.f32.xlu0 %v675
          %v686 = vpop.xlane.xlu0 %685
          %v687 = vmax.f32 %v684, %v686
          %v688 = vld [vmem:[#allocation3] sm:$0x1]
          %v689 = vsub.f32 %v684, %v687
          %v690 = vmul.f32 %v689, 1.442695
          %v691 = vpow.pop %v690
          %v692 = vmul.f32 %v688, %v691
          %694 = vset.pattern.permute.xlu0 0
          %695 = vperm.xlu0 %694, %v687
          %v696 = vpop.permute.xlu0 %695
          %v698 = vlaneseq
          %v699 = vshrl.u32 %v698, 7
          %v700 = vsub.s32 0, %v699
          %v701 = vrot.slane %v696, %v700
          %v702 = vsub.f32 %v675, %v701
          %v703 = vmul.f32 %v702, 1.442695
          %v704 = vpow.pop %v703
          %705 = vadd.xlane.f32.xlu0 %v704
          %v706 = vpop.xlane.xlu0 %705
          %v707 = vadd.f32 %v692, %v706
          %vm708 = vcmask 0
          %709 = vst.msk [vmem:[#allocation3] sm:$0x1] %vm708, %v707
          %710 = vst.msk [vmem:[#allocation2] sm:$0x1] %vm708, %v687
        $region105: #{default_mil_graph_forward.1} parent=92 // pred_fallthru
          _
        %p711 = scmp.eq.s32.totalorder %s32, 1
        // Predicated region
        $region106: #{default_mil_graph_forward.1} parent=92 // pred_check
          %p712 = pneg %p711
        $region107: #{default_mil_graph_forward.1} parent=92 // pred_check_branch
          %714 = sbr.rel (%p712) target = $region109
        $region108: #{default_mil_graph_forward.1} parent=92 // pred_region
          %v715 = vld [vmem:[%s442] sm:$0xf]
          %v716 = vld [vmem:[%s442 + $0x4] sm:$0xf]
          %v717 = vld [vmem:[%s442 + $0x8] sm:$0xf]
          %v718 = vld [vmem:[%s442 + $0xc] sm:$0xf]
          %v719 = vld [vmem:[%s442 + $0x10] sm:$0xf]
          %v720 = vld [vmem:[%s442 + $0x14] sm:$0xf]
          %v721 = vld [vmem:[%s442 + $0x18] sm:$0xf]
          %v722 = vld [vmem:[%s442 + $0x1c] sm:$0xf]
          %s723 = sshra.s32 %s477, 7
          %s724 = sand.u32 %s477, 127
          %s725 = scalar_lea.vmem [#allocation5], %s723
          %v726 = vld [vmem:[%s725] sm:$0x1]
          %v727 = vld [vmem:[#allocation2] sm:$0x1]
          %729 = vset.pattern.permute.xlu0 0
          %730 = vperm.xlu0 %729, %v727
          %v731 = vpop.permute.xlu0 %730
          %v733 = vlaneseq
          %v734 = vshrl.u32 %v733, 7
          %v735 = vsub.s32 0, %v734
          %v736 = vrot.slane %v731, %v735
          %v737 = vsub.f32 %v726, %v736
          %v738 = vmul.f32 %v737, 1.442695
          %v739 = vpow.pop %v738
          %v740 = vld [vmem:[#allocation3] sm:$0x1]
          %742 = vset.pattern.permute.xlu0 0
          %743 = vperm.xlu0 %742, %v740
          %v744 = vpop.permute.xlu0 %743
          %v746 = vlaneseq
          %v747 = vshrl.u32 %v746, 7
          %v748 = vsub.s32 0, %v747
          %v749 = vrot.slane %v744, %v748
          %v750 = vrcp.pop %v749
          %v751 = vmul.f32 %v739, %v750
          %v752 = vld [vmem:[%s5] sm:$0xf]
          %v753 = vld [vmem:[%s5 + $0x4] sm:$0xf]
          %v754 = vld [vmem:[%s5 + $0x8] sm:$0xf]
          %v755 = vld [vmem:[%s5 + $0xc] sm:$0xf]
          %v756 = vld [vmem:[%s5 + $0x10] sm:$0xf]
          %v757 = vld [vmem:[%s5 + $0x14] sm:$0xf]
          %v758 = vld [vmem:[%s5 + $0x18] sm:$0xf]
          %v759 = vld [vmem:[%s5 + $0x1c] sm:$0xf]
          %v768 = vunpack.c.l.b16 %v752
          %v769 = vunpack.c.l.b16 %v753
          %v770 = vunpack.c.l.b16 %v754
          %v771 = vunpack.c.l.b16 %v755
          %v772 = vunpack.c.l.b16 %v756
          %v773 = vunpack.c.l.b16 %v757
          %v774 = vunpack.c.l.b16 %v758
          %v775 = vunpack.c.l.b16 %v759
          %v776 = vpack.c.b16 %v769, %v768
          %v777 = vpack.c.b16 %v771, %v770
          %v778 = vpack.c.b16 %v773, %v772
          %v779 = vpack.c.b16 %v775, %v774
          %v788 = vunpack.c.l.b16 %v715
          %v789 = vunpack.c.l.b16 %v716
          %v790 = vunpack.c.l.b16 %v717
          %v791 = vunpack.c.l.b16 %v718
          %v792 = vunpack.c.l.b16 %v719
          %v793 = vunpack.c.l.b16 %v720
          %v794 = vunpack.c.l.b16 %v721
          %v795 = vunpack.c.l.b16 %v722
          %v796 = vpack.c.b16 %v789, %v788
          %v797 = vpack.c.b16 %v791, %v790
          %v798 = vpack.c.b16 %v793, %v792
          %v799 = vpack.c.b16 %v795, %v794
          %vm804 = vcmask 523264
          %v806 = vsel %vm804, %v776, 0
          %v809 = vsel %vm804, %v777, 0
          %v812 = vsel %vm804, %v778, 0
          %v815 = vsel %vm804, %v779, 0
          %817 = vmatprep.subr.bf16.mxu0 0
          %818 = vmatpush1.bf16.msra.mxu0 %v796
          %819 = vmatprep.subr.bf16.mxu0 0
          %820 = vmatpush1.bf16.msra.mxu0 %v797
          %821 = vmatprep.subr.bf16.mxu0 0
          %822 = vmatpush1.bf16.msra.mxu0 %v798
          %823 = vmatprep.subr.bf16.mxu0 0
          %824 = vmatpush1.bf16.msra.mxu0 %v799
          %825 = vmatprep.subr.bf16.mxu0 0
          %826 = vmatpush1.bf16.msra.mxu0 0
          %827 = vmatprep.subr.bf16.mxu0 0
          %828 = vmatpush1.bf16.msra.mxu0 0
          %829 = vmatprep.subr.bf16.mxu0 0
          %830 = vmatpush1.bf16.msra.mxu0 0
          %831 = vmatprep.subr.bf16.mxu0 0
          %832 = vmatpush1.bf16.msra.mxu0 0
          %833 = vmatprep.subr.bf16.mxu0 0
          %834 = vmatpush1.bf16.msra.mxu0 0
          %835 = vmatprep.subr.bf16.mxu0 0
          %836 = vmatpush1.bf16.msra.mxu0 0
          %837 = vmatprep.subr.bf16.mxu0 0
          %838 = vmatpush1.bf16.msra.mxu0 0
          %839 = vmatprep.subr.bf16.mxu0 0
          %840 = vmatpush1.bf16.msra.mxu0 0
          %841 = vmatprep.subr.bf16.mxu0 0
          %842 = vmatpush1.bf16.msra.mxu0 0
          %843 = vmatprep.subr.bf16.mxu0 0
          %844 = vmatpush1.bf16.msra.mxu0 0
          %845 = vmatprep.subr.bf16.mxu0 0
          %846 = vmatpush1.bf16.msra.mxu0 0
          %847 = vmatprep.subr.bf16.mxu0 0
          %848 = vmatpush1.bf16.msra.mxu0 0
          %849 = vmatprep.mubr.bf16.mxu0 0
          %850 = vmatmul.mubr.bf16.gmra.mrb[0].mxu0 %v806
          %v851 = vpop.f32.mrb[0].mxu0
          %v852 = vadd.f32 0.0, %v851
          %v853 = vpop.f32.mrb[0].mxu0
          %v854 = vpop.f32.mrb[0].mxu0
          %v855 = vadd.f32 0.0, %v854
          %v856 = vpop.f32.mrb[0].mxu0
          %857 = vmatprep.mubr.bf16.mxu0 0
          %858 = vmatmul.mubr.bf16.gmra.mrb[0].mxu0 %v809
          %v859 = vpop.f32.mrb[0].mxu0
          %v860 = vadd.f32 0.0, %v859
          %v861 = vpop.f32.mrb[0].mxu0
          %v862 = vpop.f32.mrb[0].mxu0
          %v863 = vadd.f32 0.0, %v862
          %v864 = vpop.f32.mrb[0].mxu0
          %865 = vmatprep.mubr.bf16.mxu0 0
          %866 = vmatmul.mubr.bf16.gmra.mrb[0].mxu0 %v812
          %v867 = vpop.f32.mrb[0].mxu0
          %v868 = vadd.f32 0.0, %v867
          %v869 = vpop.f32.mrb[0].mxu0
          %v870 = vpop.f32.mrb[0].mxu0
          %v871 = vadd.f32 0.0, %v870
          %v872 = vpop.f32.mrb[0].mxu0
          %873 = vmatprep.mubr.bf16.mxu0 0
          %874 = vmatmul.mubr.bf16.gmra.mrb[0].mxu0 %v815
          %v875 = vpop.f32.mrb[0].mxu0
          %v876 = vadd.f32 0.0, %v875
          %v877 = vpop.f32.mrb[0].mxu0
          %v878 = vpop.f32.mrb[0].mxu0
          %v879 = vadd.f32 0.0, %v878
          %v880 = vpop.f32.mrb[0].mxu0
          %881 = vdwg.mxu0
          %v883 = vlaneseq
          %v884 = vshrl.u32 %v883, 7
          %v885 = vsub.s32 0, %v884
          %v886 = vrot.slane %v751, %v885
          %v888 = vmul.f32 %v886, %v852
          %v889 = vmul.f32 %v886, %v855
          %v890 = vmul.f32 %v886, %v860
          %v891 = vmul.f32 %v886, %v863
          %v892 = vmul.f32 %v886, %v868
          %v893 = vmul.f32 %v886, %v871
          %v894 = vmul.f32 %v886, %v876
          %v895 = vmul.f32 %v886, %v879
          %v896 = vld [vmem:[%s6] sm:$0xff]
          %v897 = vld [vmem:[%s6 + $0x8] sm:$0xff]
          %v898 = vld [vmem:[%s6 + $0x10] sm:$0xff]
          %v899 = vld [vmem:[%s6 + $0x18] sm:$0xff]
          %v900 = vld [vmem:[%s6 + $0x20] sm:$0xff]
          %v901 = vld [vmem:[%s6 + $0x28] sm:$0xff]
          %v902 = vld [vmem:[%s6 + $0x30] sm:$0xff]
          %v903 = vld [vmem:[%s6 + $0x38] sm:$0xff]
          %905 = vset.pattern.permute.xlu0 0
          %906 = vperm.xlu0 %905, %v896
          %v907 = vpop.permute.xlu0 %906
          %910 = vset.pattern.permute.xlu0 0
          %911 = vperm.xlu0 %910, %v897
          %v912 = vpop.permute.xlu0 %911
          %915 = vset.pattern.permute.xlu0 0
          %916 = vperm.xlu0 %915, %v898
          %v917 = vpop.permute.xlu0 %916
          %920 = vset.pattern.permute.xlu0 0
          %921 = vperm.xlu0 %920, %v899
          %v922 = vpop.permute.xlu0 %921
          %925 = vset.pattern.permute.xlu0 0
          %926 = vperm.xlu0 %925, %v900
          %v927 = vpop.permute.xlu0 %926
          %930 = vset.pattern.permute.xlu0 0
          %931 = vperm.xlu0 %930, %v901
          %v932 = vpop.permute.xlu0 %931
          %935 = vset.pattern.permute.xlu0 0
          %936 = vperm.xlu0 %935, %v902
          %v937 = vpop.permute.xlu0 %936
          %940 = vset.pattern.permute.xlu0 0
          %941 = vperm.xlu0 %940, %v903
          %v942 = vpop.permute.xlu0 %941
          %v944 = vadd.f32 %v888, %v907
          %v945 = vadd.f32 %v889, %v912
          %v946 = vadd.f32 %v890, %v917
          %v947 = vadd.f32 %v891, %v922
          %v948 = vadd.f32 %v892, %v927
          %v949 = vadd.f32 %v893, %v932
          %v950 = vadd.f32 %v894, %v937
          %v951 = vadd.f32 %v895, %v942
          %v952 = vmax.f32 %v944, 0.0
          %v953 = vmax.f32 %v945, 0.0
          %v954 = vmax.f32 %v946, 0.0
          %v955 = vmax.f32 %v947, 0.0
          %v956 = vmax.f32 %v948, 0.0
          %v957 = vmax.f32 %v949, 0.0
          %v958 = vmax.f32 %v950, 0.0
          %v959 = vmax.f32 %v951, 0.0
          %v960 = vld [vmem:[%s7] sm:$0x3]
          %v961 = vpack.c.bf16 %v953, %v952
          %v962 = vpack.c.bf16 %v955, %v954
          %v963 = vpack.c.bf16 %v957, %v956
          %v964 = vpack.c.bf16 %v959, %v958
          %v965 = vld [vmem:[%s8] sm:$0xf]
          %967 = vset.pattern.permute.xlu0 0
          %968 = vperm.xlu0 %967, %v965
          %v969 = vpop.permute.xlu0 %968
          %v972 = vsel %vm804, %v960, 0
          %974 = vmatprep.subr.bf16.mxu0 0
          %975 = vmatpush1.bf16.msra.mxu0 %v961
          %976 = vmatprep.subr.bf16.mxu0 0
          %977 = vmatpush1.bf16.msra.mxu0 %v962
          %978 = vmatprep.subr.bf16.mxu0 0
          %979 = vmatpush1.bf16.msra.mxu0 %v963
          %980 = vmatprep.subr.bf16.mxu0 0
          %981 = vmatpush1.bf16.msra.mxu0 %v964
          %982 = vmatprep.subr.bf16.mxu0 0
          %983 = vmatpush1.bf16.msra.mxu0 0
          %984 = vmatprep.subr.bf16.mxu0 0
          %985 = vmatpush1.bf16.msra.mxu0 0
          %986 = vmatprep.subr.bf16.mxu0 0
          %987 = vmatpush1.bf16.msra.mxu0 0
          %988 = vmatprep.subr.bf16.mxu0 0
          %989 = vmatpush1.bf16.msra.mxu0 0
          %990 = vmatprep.subr.bf16.mxu0 0
          %991 = vmatpush1.bf16.msra.mxu0 0
          %992 = vmatprep.subr.bf16.mxu0 0
          %993 = vmatpush1.bf16.msra.mxu0 0
          %994 = vmatprep.subr.bf16.mxu0 0
          %995 = vmatpush1.bf16.msra.mxu0 0
          %996 = vmatprep.subr.bf16.mxu0 0
          %997 = vmatpush1.bf16.msra.mxu0 0
          %998 = vmatprep.subr.bf16.mxu0 0
          %999 = vmatpush1.bf16.msra.mxu0 0
          %1000 = vmatprep.subr.bf16.mxu0 0
          %1001 = vmatpush1.bf16.msra.mxu0 0
          %1002 = vmatprep.subr.bf16.mxu0 0
          %1003 = vmatpush1.bf16.msra.mxu0 0
          %1004 = vmatprep.subr.bf16.mxu0 0
          %1005 = vmatpush1.bf16.msra.mxu0 0
          %1006 = vmatprep.mubr.bf16.mxu0 0
          %1007 = vmatmul.mubr.bf16.gmra.mrb[0].mxu0 %v972
          %v1008 = vpop.f32.mrb[0].mxu0
          %v1009 = vadd.f32 %v969, %v1008
          %v1010 = vpop.f32.mrb[0].mxu0
          %v1011 = vpop.f32.mrb[0].mxu0
          %v1012 = vpop.f32.mrb[0].mxu0
          %1013 = vdwg.mxu0
          %v1014 = vsel %vm482, 1, 0
          %vm1015 = vcmp.eq.s32.totalorder %v1014, 1
          %v1016 = vsel %vm1015, %v1009, 0.0
          %v1017 = vld [vmem:[#allocation4] sm:$0xf]
          %vm1018 = vcmask 1043456
          %v1019 = vsel %vm1018, %v1016, 0.0
          %1020 = vadd.xlane.f32.xlu0 %v1019
          %v1021 = vpop.xlane.xlu0 %1020
          %v1022 = vadd.f32 %v1017, %v1021
          %vm1023 = vcmask 3072
          %1024 = vst.msk [vmem:[#allocation4] sm:$0xf] %vm1023, %v1022
          %v1025 = vsel %vm1018, %v1009, -inf
          %v1026 = vrot.slane %v1025, 4
          %v1027 = vmax.f32 %v1025, %v1026
          %v1028 = vrot.slane %v1027, 2
          %v1029 = vmax.f32 %v1027, %v1028
          %v1030 = vrot.slane %v1029, 1
          %v1031 = vmax.f32 %v1029, %v1030
          %v1032 = vsub.f32 %v1009, %v1031
          %v1033 = vmul.f32 %v1032, 1.442695
          %v1034 = vpow.pop %v1033
          %v1035 = vsel %vm1018, %v1034, 0.0
          %v1036 = vrot.slane %v1035, 4
          %v1037 = vadd.f32 %v1035, %v1036
          %v1038 = vrot.slane %v1037, 2
          %v1039 = vadd.f32 %v1037, %v1038
          %v1040 = vrot.slane %v1039, 1
          %v1041 = vadd.f32 %v1039, %v1040
          %v1042 = vrcp.pop %v1041
          %v1043 = vmul.f32 %v1034, %v1042
          %s1044 = smul.addr %s723, 4
          %s1045 = scalar_lea.vmem [#allocation10], %s1044
          %1046 = vst [vmem:[%s1045] sm:$0xf] %v1043
        $region109: #{default_mil_graph_forward.1} parent=92 // pred_fallthru
          _
        %p1047 = scmp.eq.s32.totalorder %s33, 1
        %p1048 = pnand %p711, %p1047
        %p1049 = pneg %p1048
        // Predicated region
        $region110: #{default_mil_graph_forward.1} parent=92 // pred_check
          _
        $region111: #{default_mil_graph_forward.1} parent=92 // pred_check_branch
          %1051 = sbr.rel (%p1048) target = $region113
        $region112: #{default_mil_graph_forward.1} parent=92 // pred_region
          %v1052 = vld [vmem:[#allocation4] sm:$0xf]
          %vm1053 = vcmask 3072
          %1054 = vst.msk [vmem:[%s9] sm:$0xf] %vm1053, %v1052
          %v1055 = vsel %vm1053, %v1052, -inf
          %v1056 = vrot.slane %v1055, 4
          %v1057 = vmax.f32 %v1055, %v1056
          %v1058 = vrot.slane %v1057, 2
          %v1059 = vmax.f32 %v1057, %v1058
          %v1060 = vrot.slane %v1059, 1
          %v1061 = vmax.f32 %v1059, %v1060
          %v1062 = vsub.f32 %v1052, %v1061
          %v1063 = vmul.f32 %v1062, 1.442695
          %v1064 = vpow.pop %v1063
          %v1065 = vsel %vm1053, %v1064, 0.0
          %v1066 = vrot.slane %v1065, 4
          %v1067 = vadd.f32 %v1065, %v1066
          %v1068 = vrot.slane %v1067, 2
          %v1069 = vadd.f32 %v1067, %v1068
          %v1070 = vrot.slane %v1069, 1
          %v1071 = vadd.f32 %v1069, %v1070
          %v1072 = vrcp.pop %v1071
          %v1073 = vmul.f32 %v1064, %v1072
          %1074 = vst.msk [vmem:[%s10] sm:$0xf] %vm1053, %v1073
          %v1075 = vlaneseq
          %v1076 = vshrl.u32 %v1075, 7
          %vm1077 = vcmp.eq.f32.partialorder %v1052, %v1061
          %v1078 = vsel %vm1077, %v1076, 4
          %v1079 = vsel %vm1053, %v1078, 2147483647
          %v1080 = vrot.slane %v1079, 4
          %vm1081 = vcmp.lt.s32.totalorder %v1079, %v1080
          %v1082 = vsel %vm1081, %v1079, %v1080
          %v1083 = vrot.slane %v1082, 2
          %vm1084 = vcmp.lt.s32.totalorder %v1082, %v1083
          %v1085 = vsel %vm1084, %v1082, %v1083
          %v1086 = vrot.slane %v1085, 1
          %vm1087 = vcmp.lt.s32.totalorder %v1085, %v1086
          %v1088 = vsel %vm1087, %v1085, %v1086
          %vm1089 = vcmask 0
          %1090 = vst.msk [vmem:[#allocation8] sm:$0x1] %vm1089, %v1088
        $region113: #{default_mil_graph_forward.1} parent=92 // pred_fallthru
          _
        // Predicated region
        $region114: #{default_mil_graph_forward.1} parent=92 // pred_check
          %p1091 = pneg %p247
        $region115: #{default_mil_graph_forward.1} parent=92 // pred_check_branch
          %1093 = sbr.rel (%p1091) target = $region117
        $region116: #{default_mil_graph_forward.1} parent=92 // pred_region
          _
        $region117: #{default_mil_graph_forward.1} parent=92 // pred_fallthru
          _
        // Predicated region
        $region118: #{default_mil_graph_forward.1} parent=92 // pred_check
          %p1094 = pneg %p268
        $region119: #{default_mil_graph_forward.1} parent=92 // pred_check_branch
          %1096 = sbr.rel (%p1094) target = $region121
        $region120: #{default_mil_graph_forward.1} parent=92 // pred_region
          _
        $region121: #{default_mil_graph_forward.1} parent=92 // pred_fallthru
          _
        // Predicated region
        $region122: #{default_mil_graph_forward.1} parent=92 // pred_check
          %p1097 = pneg %p289
        $region123: #{default_mil_graph_forward.1} parent=92 // pred_check_branch
          %1099 = sbr.rel (%p1097) target = $region125
        $region124: #{default_mil_graph_forward.1} parent=92 // pred_region
          %s1101 = ssub.s32 16, 16
          %1102 = vsyncadd [#allocation9], %s1101
          %s1104 = sshll.u32 [#allocation8], 4
          %s1105 = int_to_ptr.vmem [resolvable:$true] %s1104
          %1107 = dma.vmem_to_hbm [thread:$0]  %s1105, 16, %s11, [#allocation9]
        $region125: #{default_mil_graph_forward.1} parent=92 // pred_fallthru
          _
        // Predicated region
        $region126: #{default_mil_graph_forward.1} parent=92 // pred_check
          %p1108 = pneg %p310
        $region127: #{default_mil_graph_forward.1} parent=92 // pred_check_branch
          %1110 = sbr.rel (%p1108) target = $region129
        $region128: #{default_mil_graph_forward.1} parent=92 // pred_region
          %s1112 = ssub.s32 128, 128
          %1113 = vsyncadd [#allocation11], %s1112
          %s1115 = sshll.u32 [#allocation10], 4
          %s1116 = int_to_ptr.vmem [resolvable:$true] %s1115
          %1118 = dma.vmem_to_hbm [thread:$0]  %s1116, 128, %s12, [#allocation11]
        $region129: #{default_mil_graph_forward.1} parent=92 // pred_fallthru
          _
        // Predicated region
        $region130: #{default_mil_graph_forward.1} parent=92 // pred_check
          %p1119 = pneg %p247
        $region131: #{default_mil_graph_forward.1} parent=92 // pred_check_branch
          %1121 = sbr.rel (%p1119) target = $region133
        $region132: #{default_mil_graph_forward.1} parent=92 // pred_region
          _
        $region133: #{default_mil_graph_forward.1} parent=92 // pred_fallthru
          _
        // Predicated region
        $region134: #{default_mil_graph_forward.1} parent=92 // pred_check
          %p1122 = pneg %p268
        $region135: #{default_mil_graph_forward.1} parent=92 // pred_check_branch
          %1124 = sbr.rel (%p1122) target = $region137
        $region136: #{default_mil_graph_forward.1} parent=92 // pred_region
          _
        $region137: #{default_mil_graph_forward.1} parent=92 // pred_fallthru
          _
        // Predicated region
        $region138: #{default_mil_graph_forward.1} parent=92 // pred_check
          %p1125 = pneg %p289
        $region139: #{default_mil_graph_forward.1} parent=92 // pred_check_branch
          %1127 = sbr.rel (%p1125) target = $region141
        $region140: #{default_mil_graph_forward.1} parent=92 // pred_region
          %1128 = dma.done [#allocation9], 16
        $region141: #{default_mil_graph_forward.1} parent=92 // pred_fallthru
          _
        // Predicated region
        $region142: #{default_mil_graph_forward.1} parent=92 // pred_check
          %p1129 = pneg %p310
        $region143: #{default_mil_graph_forward.1} parent=92 // pred_check_branch
          %1131 = sbr.rel (%p1129) target = $region145
        $region144: #{default_mil_graph_forward.1} parent=92 // pred_region
          %1132 = dma.done [#allocation11], 128
        $region145: #{default_mil_graph_forward.1} parent=92 // pred_fallthru
          _
      $region93: #{default_mil_graph_forward.1} parent=5 // pred_fallthru
        _
      %p1133 = scmp.le.s32.totalorder 2, %s23
      // Predicated region
      $region146: #{default_mil_graph_forward.1} parent=5 // pred_check
        %p1134 = pneg %p1133
      $region147: #{default_mil_graph_forward.1} parent=5 // pred_check_branch
        %1136 = sbr.rel (%p1134) target = $region149
      $region148: #{default_mil_graph_forward.1} parent=5 // pred_region
        %s1137 = ssub.s32 %s23, 2
      $region149: #{default_mil_graph_forward.1} parent=5 // pred_fallthru
        _
    $region6: #{default_mil_graph_forward.1} parent=1 // loop_footer
      %s27 = sadd.s32 1, %s23
    $region7: #{default_mil_graph_forward.1} parent=1 // loop_footer_branch
      %22 = sbr.rel target = $region3
    $region8: #{default_mil_graph_forward.1} parent=1 // loop_exit
      _
    %1138 = vsyncpa [#allocation9], 1
    %s1139 = scalar_lea.sflag [#allocation9], 1
    %1140 = vsyncpa %s1139, 1
    %1141 = vsyncpa [#allocation11], 1

</llo_original>
